<compile_context>
chip_gen: v7x
topology: tpu7x:2x2x1
jax: 0.10.0
libtpu: 0.0.40
codegen_flags: <defaults>
</compile_context>

<pallas_src>
import jax
import jax.numpy as jnp
from jax.experimental import pallas as pl
from jax.experimental.pallas import tpu as pltpu

# ------------------------- hyper-parameters (small synthetic config) -------------------------
NUM_HETEROS = 4          # c (heterogeneous groups / channels)
NUM_TS      = 8          # n (number of time series / graph nodes)
TIME_LAGS   = 8          # t
NUM_BLOCKS  = 2
K_HOPS      = 2          # k (graph-conv hops)
EMB_DIM     = 16
TOP_K       = 4
ALPHA       = 3.0
KT          = 3          # temporal-conv kernel width (causal padding keeps T)
BATCH       = 2
G_DEC       = NUM_BLOCKS + 2          # channels per hetero group entering fc_decode

T_ROWS = TIME_LAGS                    # sublane (row) extent        = 8
GRP    = BATCH * NUM_TS               # lanes per hetero group      = 16
LANES  = NUM_HETEROS * GRP            # folded lane extent          = 64


# ------------------------- static row layout of the packed parameter table -------------------------
def _build_row_layout():
    layout, cursor = {}, 0

    def add(name, k=1):
        nonlocal cursor
        layout[name] = cursor
        cursor += k

    add('proj_w'); add('proj_b')
    for i in range(NUM_BLOCKS):
        add(f'wf{i}', KT); add(f'wg{i}', KT)
        add(f'bf{i}'); add(f'bg{i}'); add(f'gw{i}'); add(f'gb{i}')
    add('dec_w', G_DEC); add('dec_b')
    add('bn1_scale'); add('bn1_shift')
    add('res_dw'); add('res_db')
    add('bn2_scale'); add('bn2_shift')
    add('res_fb')
    add('mask_wf', KT); add('mask_wg', KT)
    add('mask_bf'); add('mask_bg')
    add('beta')
    return layout, cursor


_ROWS, _NUM_ROWS = _build_row_layout()


# ===================================== fused Pallas kernel =====================================

def _gelu(x):
    # TODO(synk): tanh-approximate GELU inside the kernel (PyTorch nn.GELU default is exact erf).
    c = 0.7978845608028654  # sqrt(2/pi)
    return 0.5 * x * (1.0 + jnp.tanh(c * (x + 0.044715 * x * x * x)))


def _fused_forward_kernel(x_ref, mask_ref, vecs_ref, mats_ref, headw_ref, headb_ref, out_ref):
    """Whole HeteroMTGNN forward on (T, C*B*N)-folded activations, fully VMEM-resident."""
    a_bd = mats_ref[0]      # (L, L) block-diag normalized adjacency, pre-scaled by (1 - beta)
    w_mix = mats_ref[1]     # (L, L) kron(res_fw.T, I_{B*N})  (full 1x1 channel mixing)
    row_ids = jax.lax.broadcasted_iota(jnp.int32, (T_ROWS, LANES), 0)

    def vrow(name, d=0):
        i = _ROWS[name] + d
        return vecs_ref[i:i + 1, :]                     # (1, L) lane vector

    def gated_tconv(h, wf, wg, bf, bg):
        # depthwise (grouped) causal gated temporal conv: tanh(conv_f) * sigmoid(conv_g)
        # shift-by-s == sublane roll + zero the first s (causally invalid) rows.
        taps = [h]
        for s in range(1, KT):
            taps.append(jnp.where(row_ids >= s, pltpu.roll(h, shift=s, axis=0), 0.0))
        accf = vrow(wf, KT - 1) * taps[0]
        accg = vrow(wg, KT - 1) * taps[0]
        for s in range(1, KT):
            d = KT - 1 - s
            accf = accf + vrow(wf, d) * taps[s]
            accg = accg + vrow(wg, d) * taps[s]
        return jnp.tanh(accf + vrow(bf)) * jax.nn.sigmoid(accg + vrow(bg))

    def mixhop(x0):
        # TODO(synk): h @ A aggregation direction and hops-1..k averaging reconstructed from MTGNN.
        bx0 = x0 * vrow('beta')          # beta * x0 (beta packed as a lane row)
        h = x0
        acc = None
        for _ in range(K_HOPS):
            h = bx0 + jnp.dot(h, a_bd, preferred_element_type=jnp.float32)   # a_bd has (1-beta) folded in
            acc = h if acc is None else acc + h
        return acc                        # 1/K_HOPS folded into gw at pack time

    # ---- projection (grouped 1x1 conv == per-channel scale + bias) ----
    x = x_ref[...] * vrow('proj_w') + vrow('proj_b')

    # ---- hetero blocks: gated tconv -> mix-hop gconv -> residual ----
    stage = [x]                            # fc_decode slot j = 0
    out = x
    for i in range(NUM_BLOCKS):
        tc = gated_tconv(out, f'wf{i}', f'wg{i}', f'bf{i}', f'bg{i}')
        gc = mixhop(tc)
        out = out + gc * vrow(f'gw{i}') + vrow(f'gb{i}')
        stage.append(tc)                   # slot j = i + 1
    stage.append(out)                      # slot j = num_blocks + 1

    # ---- fc_decode: grouped 1x1 -> BN -> GELU -> ResidualAdd(grouped 1x1, BN, GELU, full 1x1) -> GELU
    dec = vrow('dec_w', 0) * stage[0]
    for j in range(1, G_DEC):
        dec = dec + vrow('dec_w', j) * stage[j]
    dec = dec + vrow('dec_b')
    y = _gelu(dec * vrow('bn1_scale') + vrow('bn1_shift'))
    inner = y * vrow('res_dw') + vrow('res_db')
    inner = _gelu(inner * vrow('bn2_scale') + vrow('bn2_shift'))
    inner = jnp.dot(inner, w_mix, preferred_element_type=jnp.float32) + vrow('res_fb')
    y = _gelu(y + inner)

    hw = headw_ref[...]                    # (2C, C*T) block-packed head weights
    hb = headb_ref[...]                    # (2C, 1)

    # ---- fc_out: Conv2d(C, C, (T,1)) + tanh  -> restack (T, C*B*N) to (C*T, B*N), ONE dot ----
    ystack = jnp.concatenate([y[:, c * GRP:(c + 1) * GRP] for c in range(NUM_HETEROS)], axis=0)
    outs_label = jnp.tanh(
        jnp.dot(hw[:NUM_HETEROS], ystack, preferred_element_type=jnp.float32) + hb[:NUM_HETEROS])

    # ---- mask head: ResidualAdd(gated tconv) -> grouped (T,1) conv -> sigmoid (independent chain) ----
    m = mask_ref[...]
    m = m + gated_tconv(m, 'mask_wf', 'mask_wg', 'mask_bf', 'mask_bg')
    mstack = jnp.concatenate([m[:, c * GRP:(c + 1) * GRP] for c in range(NUM_HETEROS)], axis=0)
    outs_mask = jax.nn.sigmoid(
        jnp.dot(hw[NUM_HETEROS:], mstack, preferred_element_type=jnp.float32) + hb[NUM_HETEROS:])

    # single dense store: rows [0:C)=preds, [C:2C)=label, [2C:3C)=mask ; lanes = (b, n)
    out_ref[...] = jnp.concatenate([outs_label * outs_mask, outs_label, outs_mask], axis=0)


# ============================ parameter packing (one-time, wrapper-side) ============================

def _expand(v):
    """(C,) -> (1, C*B*N) lane vector (value repeated over the B*N lanes of its group)."""
    return jnp.repeat(v.astype(jnp.float32), GRP)[None, :]


def _expand_rows(m):
    """(C, K) -> (K, C*B*N) : row k, lanes [c*GRP:(c+1)*GRP] = m[c, k]."""
    return jnp.repeat(m.T.astype(jnp.float32), GRP, axis=1)


def _bn_affine(bn, eps=1e-5):
    # TODO(synk): BatchNorm2d implemented in eval mode (running stats), not training-mode batch stats.
    gamma, beta_, mean, var = bn
    scale = gamma * jax.lax.rsqrt(var + eps)
    return scale, beta_ - mean * scale


def build_adjacency(p, alpha, top_k):
    """AdjConstructor (MTGNN graph-learning layer): asymmetric tanh graph + per-row top-k mask."""
    m1 = jnp.tanh(alpha * (p['emb1'] @ p['w1'] + p['b1']))
    m2 = jnp.tanh(alpha * (p['emb2'] @ p['w2'] + p['b2']))
    a = jax.nn.relu(jnp.tanh(alpha * (m1 @ m2.T - m2 @ m1.T)))
    _, idx = jax.lax.top_k(a, top_k)
    mask = jnp.zeros_like(a)
    mask = jax.vmap(lambda row_m, row_i: row_m.at[row_i].set(1.0))(mask, idx)
    return a * mask


def normalize_adj(a):
    n = a.shape[-1]
    a_hat = a + jnp.eye(n, dtype=a.dtype)
    d = a_hat.sum(-1, keepdims=True)
    return a_hat / d


def _pack_vecs(params, beta):
    pieces = [_expand(params['proj_w']), _expand(params['proj_b'])]
    for i in range(NUM_BLOCKS):
        bp = params['blocks'][i]
        pieces += [_expand_rows(bp['wf']), _expand_rows(bp['wg']),
                   _expand(bp['bf']), _expand(bp['bg']),
                   _expand(bp['gw'] * (1.0 / K_HOPS)),   # fold 1/K_HOPS into gconv gain
                   _expand(bp['gb'])]
    pieces += [_expand_rows(params['dec_w']), _expand(params['dec_b'])]
    s1, sh1 = _bn_affine(params['bn1'])
    pieces += [_expand(s1), _expand(sh1)]
    pieces += [_expand(params['res_dw']), _expand(params['res_db'])]
    s2, sh2 = _bn_affine(params['bn2'])
    pieces += [_expand(s2), _expand(sh2)]
    pieces += [_expand(params['res_fb'])]
    pieces += [_expand_rows(params['mask_wf']), _expand_rows(params['mask_wg']),
               _expand(params['mask_bf']), _expand(params['mask_bg'])]
    pieces += [jnp.full((1, LANES), beta, jnp.float32)]
    vecs = jnp.concatenate(pieces, axis=0)
    assert vecs.shape == (_NUM_ROWS, LANES)
    return vecs


def _pack_mats(params, beta):
    A = jnp.stack([build_adjacency(p, ALPHA, TOP_K) for p in params['adj']])
    A_norm = normalize_adj(A)                                           # (C, N, N)
    # lane order is (c, b, n): one adjacency block per (c, b) group, pre-scaled by (1 - beta)
    blocks = [A_norm[c] for c in range(NUM_HETEROS) for _ in range(BATCH)]
    a_bd = jax.scipy.linalg.block_diag(*blocks) * (1.0 - beta)          # (L, L)
    w_mix = jnp.kron(params['res_fw'].T.astype(jnp.float32),
                     jnp.eye(GRP, dtype=jnp.float32))                   # (L, L)
    return jnp.stack([a_bd.astype(jnp.float32), w_mix])


def _pack_head_w(params):
    # label head: Conv2d(C, C, (T,1)) weight already laid out as (o, c*T + t)
    w_lab = params['out_w'].astype(jnp.float32)                          # (C, C*T)
    # mask head: grouped Conv2d(C, C, (T,1), groups=C) -> block-diagonal over c
    w_msk = jax.scipy.linalg.block_diag(
        *[params['mask_cw'][c:c + 1].astype(jnp.float32) for c in range(NUM_HETEROS)])  # (C, C*T)
    return jnp.concatenate([w_lab, w_msk], axis=0)                       # (2C, C*T)


def _pack_head_b(params):
    return jnp.concatenate([params['out_b'].reshape(NUM_HETEROS, 1),
                            params['mask_cb'].reshape(NUM_HETEROS, 1)],
                           axis=0).astype(jnp.float32)                   # (2C, 1)


def pack_params(params, beta):
    """One-time parameter packing. Run OUTSIDE the per-call jitted forward (params are static)."""
    return {'vecs': _pack_vecs(params, beta),
            'mats': _pack_mats(params, beta),
            'head_w': _pack_head_w(params),
            'head_b': _pack_head_b(params)}


# ===================================== forward pass =====================================

_VMEM = pl.BlockSpec(memory_space=pltpu.MemorySpace.VMEM)


@jax.jit
def hetero_mtgnn_forward(packed, x_input, x_mask):
    # fold (B, C, T, N) -> (T, C*B*N): rows = t (sublanes), lanes = (c, b, n)
    x_fold = x_input.transpose(2, 1, 0, 3).reshape(T_ROWS, LANES).astype(jnp.float32)
    m_fold = x_mask.transpose(2, 1, 0, 3).reshape(T_ROWS, LANES).astype(jnp.float32)

    out = pl.pallas_call(
        _fused_forward_kernel,
        out_shape=jax.ShapeDtypeStruct((3 * NUM_HETEROS, GRP), jnp.float32),
        in_specs=[_VMEM] * 6,
        out_specs=_VMEM,
    )(x_fold, m_fold, packed['vecs'], packed['mats'], packed['head_w'], packed['head_b'])
    # TODO(synk): whole model fits one TensorCore at these shapes; add a leading "parallel"
    # batch grid axis (dimension_semantics) for v7x only if BATCH / NUM_HETEROS scale up.

    def unfold(z):   # (C, B*N) -> (B, C, 1, N)
        return z.reshape(NUM_HETEROS, BATCH, NUM_TS).transpose(1, 0, 2)[:, :, None, :]

    C = NUM_HETEROS
    return {'preds': unfold(out[0:C]),
            'outs_label': unfold(out[C:2 * C]),
            'outs_mask': unfold(out[2 * C:3 * C]),
            'kl_loss': None, 'adj_mat': None}


# ===================================== parameter init =====================================

def init_params(key):
    keys = iter(jax.random.split(key, 64))

    def nrm(shape, scale=0.1):
        return scale * jax.random.normal(next(keys), shape, jnp.float32)

    C, N, T, E = NUM_HETEROS, NUM_TS, TIME_LAGS, EMB_DIM
    p = {
        'proj_w': 1.0 + nrm((C,)), 'proj_b': nrm((C,)),
        'adj': [
            {'emb1': nrm((N, E), 1.0), 'emb2': nrm((N, E), 1.0),
             'w1': nrm((E, E)), 'b1': nrm((E,)),
             'w2': nrm((E, E)), 'b2': nrm((E,))}
            for _ in range(C)
        ],
        'blocks': [
            {'wf': nrm((C, KT)), 'wg': nrm((C, KT)),
             'bf': nrm((C,)), 'bg': nrm((C,)),
             'gw': 1.0 + nrm((C,)), 'gb': nrm((C,))}
            for _ in range(NUM_BLOCKS)
        ],
        'dec_w': nrm((C, G_DEC)), 'dec_b': nrm((C,)),
        'bn1': (jnp.ones((C,)), jnp.zeros((C,)), jnp.zeros((C,)), jnp.ones((C,))),
        'bn2': (jnp.ones((C,)), jnp.zeros((C,)), jnp.zeros((C,)), jnp.ones((C,))),
        'res_dw': 1.0 + nrm((C,)), 'res_db': nrm((C,)),
        'res_fw': nrm((C, C)), 'res_fb': nrm((C,)),
        'out_w': nrm((C, C * T)), 'out_b': nrm((C, 1)),
        'mask_wf': nrm((C, KT)), 'mask_wg': nrm((C, KT)),
        'mask_bf': nrm((C,)), 'mask_bg': nrm((C,)),
        'mask_cw': nrm((C, T)), 'mask_cb': nrm((C,)),
    }
    return p


# ===================================== main =====================================

if __name__ == "__main__":
    key = jax.random.PRNGKey(0)
    kp, kx, km = jax.random.split(key, 3)
    params = init_params(kp)

    x_input = jax.random.normal(kx, (BATCH, NUM_HETEROS, TIME_LAGS, NUM_TS), jnp.float32)
    x_mask = (jax.random.uniform(km, (BATCH, NUM_HETEROS, TIME_LAGS, NUM_TS)) > 0.2).astype(jnp.float32)
    beta = 0.5

    # one-time packing (graph construction, block_diag, kron, repeats) — NOT in the forward path
    packed = pack_params(params, beta)

    out = hetero_mtgnn_forward(packed, x_input, x_mask)
    jax.block_until_ready(out['preds'])

    assert out['preds'].shape == (BATCH, NUM_HETEROS, 1, NUM_TS)
    assert out['outs_label'].shape == (BATCH, NUM_HETEROS, 1, NUM_TS)
    assert out['outs_mask'].shape == (BATCH, NUM_HETEROS, 1, NUM_TS)
    assert bool(jnp.all(jnp.isfinite(out['preds'])))
    print("KERNEL_OK")
</pallas_src>

<mosaic_0001>
module attributes {stable_mosaic.version = 11 : i64} {
  func.func @_fused_forward_kernel(%arg0: memref<8x64xf32, #tpu.memory_space<vmem>>, %arg1: memref<8x64xf32, #tpu.memory_space<vmem>>, %arg2: memref<43x64xf32, #tpu.memory_space<vmem>>, %arg3: memref<2x64x64xf32, #tpu.memory_space<vmem>>, %arg4: memref<8x32xf32, #tpu.memory_space<vmem>>, %arg5: memref<8x1xf32, #tpu.memory_space<vmem>>, %arg6: memref<12x16xf32, #tpu.memory_space<vmem>>) attributes {dimension_semantics = [], scalar_prefetch = 0 : i64, scratch_operands = 0 : i64, tpu.core_type = #tpu.core_type<tc>} {
    %c0 = arith.constant 0 : index
    %c0_0 = arith.constant 0 : index
    %c0_1 = arith.constant 0 : index
    %0 = vector.load %arg3[%c0, %c0_0, %c0_1] : memref<2x64x64xf32, #tpu.memory_space<vmem>>, vector<1x64x64xf32>
    %1 = vector.shape_cast %0 : vector<1x64x64xf32> to vector<64x64xf32>
    %c1 = arith.constant 1 : index
    %c0_2 = arith.constant 0 : index
    %c0_3 = arith.constant 0 : index
    %2 = vector.load %arg3[%c1, %c0_2, %c0_3] : memref<2x64x64xf32, #tpu.memory_space<vmem>>, vector<1x64x64xf32>
    %3 = vector.shape_cast %2 : vector<1x64x64xf32> to vector<64x64xf32>
    %4 = tpu.iota {dimensions = array<i32: 0>} : vector<8x64xi32>
    %c0_4 = arith.constant 0 : index
    %c0_5 = arith.constant 0 : index
    %5 = vector.load %arg0[%c0_4, %c0_5] : memref<8x64xf32, #tpu.memory_space<vmem>>, vector<8x64xf32>
    %c0_6 = arith.constant 0 : index
    %c0_7 = arith.constant 0 : index
    %6 = vector.load %arg2[%c0_6, %c0_7] : memref<43x64xf32, #tpu.memory_space<vmem>>, vector<1x64xf32>
    %7 = vector.broadcast %6 : vector<1x64xf32> to vector<8x64xf32>
    %8 = arith.mulf %5, %7 : vector<8x64xf32>
    %c1_8 = arith.constant 1 : index
    %c0_9 = arith.constant 0 : index
    %9 = vector.load %arg2[%c1_8, %c0_9] : memref<43x64xf32, #tpu.memory_space<vmem>>, vector<1x64xf32>
    %10 = vector.broadcast %9 : vector<1x64xf32> to vector<8x64xf32>
    %11 = arith.addf %8, %10 : vector<8x64xf32>
    %c1_i32 = arith.constant 1 : i32
    %12 = vector.broadcast %c1_i32 : i32 to vector<8x64xi32>
    %13 = arith.cmpi sge, %4, %12 : vector<8x64xi32>
    %c1_i32_10 = arith.constant 1 : i32
    %14 = tpu.dynamic_rotate %11 by %c1_i32_10 dim 0 : vector<8x64xf32>, i32 -> vector<8x64xf32>
    %cst = arith.constant 0.000000e+00 : f32
    %15 = vector.broadcast %cst : f32 to vector<8x64xf32>
    %16 = arith.select %13, %14, %15 : vector<8x64xi1>, vector<8x64xf32>
    %c2_i32 = arith.constant 2 : i32
    %17 = vector.broadcast %c2_i32 : i32 to vector<8x64xi32>
    %18 = arith.cmpi sge, %4, %17 : vector<8x64xi32>
    %c2_i32_11 = arith.constant 2 : i32
    %19 = tpu.dynamic_rotate %11 by %c2_i32_11 dim 0 : vector<8x64xf32>, i32 -> vector<8x64xf32>
    %cst_12 = arith.constant 0.000000e+00 : f32
    %20 = vector.broadcast %cst_12 : f32 to vector<8x64xf32>
    %21 = arith.select %18, %19, %20 : vector<8x64xi1>, vector<8x64xf32>
    %c4 = arith.constant 4 : index
    %c0_13 = arith.constant 0 : index
    %22 = vector.load %arg2[%c4, %c0_13] : memref<43x64xf32, #tpu.memory_space<vmem>>, vector<1x64xf32>
    %23 = vector.broadcast %22 : vector<1x64xf32> to vector<8x64xf32>
    %24 = arith.mulf %23, %11 : vector<8x64xf32>
    %c7 = arith.constant 7 : index
    %c0_14 = arith.constant 0 : index
    %25 = vector.load %arg2[%c7, %c0_14] : memref<43x64xf32, #tpu.memory_space<vmem>>, vector<1x64xf32>
    %26 = vector.broadcast %25 : vector<1x64xf32> to vector<8x64xf32>
    %27 = arith.mulf %26, %11 : vector<8x64xf32>
    %c3 = arith.constant 3 : index
    %c0_15 = arith.constant 0 : index
    %28 = vector.load %arg2[%c3, %c0_15] : memref<43x64xf32, #tpu.memory_space<vmem>>, vector<1x64xf32>
    %29 = vector.broadcast %28 : vector<1x64xf32> to vector<8x64xf32>
    %30 = arith.mulf %29, %16 : vector<8x64xf32>
    %31 = arith.addf %24, %30 : vector<8x64xf32>
    %c6 = arith.constant 6 : index
    %c0_16 = arith.constant 0 : index
    %32 = vector.load %arg2[%c6, %c0_16] : memref<43x64xf32, #tpu.memory_space<vmem>>, vector<1x64xf32>
    %33 = vector.broadcast %32 : vector<1x64xf32> to vector<8x64xf32>
    %34 = arith.mulf %33, %16 : vector<8x64xf32>
    %35 = arith.addf %27, %34 : vector<8x64xf32>
    %c2 = arith.constant 2 : index
    %c0_17 = arith.constant 0 : index
    %36 = vector.load %arg2[%c2, %c0_17] : memref<43x64xf32, #tpu.memory_space<vmem>>, vector<1x64xf32>
    %37 = vector.broadcast %36 : vector<1x64xf32> to vector<8x64xf32>
    %38 = arith.mulf %37, %21 : vector<8x64xf32>
    %39 = arith.addf %31, %38 : vector<8x64xf32>
    %c5 = arith.constant 5 : index
    %c0_18 = arith.constant 0 : index
    %40 = vector.load %arg2[%c5, %c0_18] : memref<43x64xf32, #tpu.memory_space<vmem>>, vector<1x64xf32>
    %41 = vector.broadcast %40 : vector<1x64xf32> to vector<8x64xf32>
    %42 = arith.mulf %41, %21 : vector<8x64xf32>
    %43 = arith.addf %35, %42 : vector<8x64xf32>
    %c8 = arith.constant 8 : index
    %c0_19 = arith.constant 0 : index
    %44 = vector.load %arg2[%c8, %c0_19] : memref<43x64xf32, #tpu.memory_space<vmem>>, vector<1x64xf32>
    %45 = vector.broadcast %44 : vector<1x64xf32> to vector<8x64xf32>
    %46 = arith.addf %39, %45 : vector<8x64xf32>
    %47 = math.tanh %46 : vector<8x64xf32>
    %c9 = arith.constant 9 : index
    %c0_20 = arith.constant 0 : index
    %48 = vector.load %arg2[%c9, %c0_20] : memref<43x64xf32, #tpu.memory_space<vmem>>, vector<1x64xf32>
    %49 = vector.broadcast %48 : vector<1x64xf32> to vector<8x64xf32>
    %50 = arith.addf %43, %49 : vector<8x64xf32>
    %51 = arith.negf %50 : vector<8x64xf32>
    %52 = math.exp %51 : vector<8x64xf32>
    %cst_21 = arith.constant 1.000000e+00 : f32
    %53 = vector.broadcast %cst_21 : f32 to vector<8x64xf32>
    %54 = arith.addf %53, %52 : vector<8x64xf32>
    %55 = arith.divf %53, %54 : vector<8x64xf32>
    %56 = arith.mulf %47, %55 : vector<8x64xf32>
    %c42 = arith.constant 42 : index
    %c0_22 = arith.constant 0 : index
    %57 = vector.load %arg2[%c42, %c0_22] : memref<43x64xf32, #tpu.memory_space<vmem>>, vector<1x64xf32>
    %58 = vector.broadcast %57 : vector<1x64xf32> to vector<8x64xf32>
    %59 = arith.mulf %56, %58 : vector<8x64xf32>
    %cst_23 = arith.constant dense<0.000000e+00> : vector<8x64xf32>
    %60 = tpu.matmul %56, %1, %cst_23 {dimension_numbers = #tpu.dot_dimension_numbers<[1], [0], [0], [1], [0, 0, 1, 1], [], []>} : vector<8x64xf32>, vector<64x64xf32>, vector<8x64xf32> -> vector<8x64xf32>
    %61 = arith.addf %59, %60 : vector<8x64xf32>
    %cst_24 = arith.constant dense<0.000000e+00> : vector<8x64xf32>
    %62 = tpu.matmul %61, %1, %cst_24 {dimension_numbers = #tpu.dot_dimension_numbers<[1], [0], [0], [1], [0, 0, 1, 1], [], []>} : vector<8x64xf32>, vector<64x64xf32>, vector<8x64xf32> -> vector<8x64xf32>
    %63 = arith.addf %59, %62 : vector<8x64xf32>
    %64 = arith.addf %61, %63 : vector<8x64xf32>
    %c10 = arith.constant 10 : index
    %c0_25 = arith.constant 0 : index
    %65 = vector.load %arg2[%c10, %c0_25] : memref<43x64xf32, #tpu.memory_space<vmem>>, vector<1x64xf32>
    %66 = vector.broadcast %65 : vector<1x64xf32> to vector<8x64xf32>
    %67 = arith.mulf %64, %66 : vector<8x64xf32>
    %68 = arith.addf %11, %67 : vector<8x64xf32>
    %c11 = arith.constant 11 : index
    %c0_26 = arith.constant 0 : index
    %69 = vector.load %arg2[%c11, %c0_26] : memref<43x64xf32, #tpu.memory_space<vmem>>, vector<1x64xf32>
    %70 = vector.broadcast %69 : vector<1x64xf32> to vector<8x64xf32>
    %71 = arith.addf %68, %70 : vector<8x64xf32>
    %c1_i32_27 = arith.constant 1 : i32
    %72 = vector.broadcast %c1_i32_27 : i32 to vector<8x64xi32>
    %73 = arith.cmpi sge, %4, %72 : vector<8x64xi32>
    %c1_i32_28 = arith.constant 1 : i32
    %74 = tpu.dynamic_rotate %71 by %c1_i32_28 dim 0 : vector<8x64xf32>, i32 -> vector<8x64xf32>
    %cst_29 = arith.constant 0.000000e+00 : f32
    %75 = vector.broadcast %cst_29 : f32 to vector<8x64xf32>
    %76 = arith.select %73, %74, %75 : vector<8x64xi1>, vector<8x64xf32>
    %c2_i32_30 = arith.constant 2 : i32
    %77 = vector.broadcast %c2_i32_30 : i32 to vector<8x64xi32>
    %78 = arith.cmpi sge, %4, %77 : vector<8x64xi32>
    %c2_i32_31 = arith.constant 2 : i32
    %79 = tpu.dynamic_rotate %71 by %c2_i32_31 dim 0 : vector<8x64xf32>, i32 -> vector<8x64xf32>
    %cst_32 = arith.constant 0.000000e+00 : f32
    %80 = vector.broadcast %cst_32 : f32 to vector<8x64xf32>
    %81 = arith.select %78, %79, %80 : vector<8x64xi1>, vector<8x64xf32>
    %c14 = arith.constant 14 : index
    %c0_33 = arith.constant 0 : index
    %82 = vector.load %arg2[%c14, %c0_33] : memref<43x64xf32, #tpu.memory_space<vmem>>, vector<1x64xf32>
    %83 = vector.broadcast %82 : vector<1x64xf32> to vector<8x64xf32>
    %84 = arith.mulf %83, %71 : vector<8x64xf32>
    %c17 = arith.constant 17 : index
    %c0_34 = arith.constant 0 : index
    %85 = vector.load %arg2[%c17, %c0_34] : memref<43x64xf32, #tpu.memory_space<vmem>>, vector<1x64xf32>
    %86 = vector.broadcast %85 : vector<1x64xf32> to vector<8x64xf32>
    %87 = arith.mulf %86, %71 : vector<8x64xf32>
    %c13 = arith.constant 13 : index
    %c0_35 = arith.constant 0 : index
    %88 = vector.load %arg2[%c13, %c0_35] : memref<43x64xf32, #tpu.memory_space<vmem>>, vector<1x64xf32>
    %89 = vector.broadcast %88 : vector<1x64xf32> to vector<8x64xf32>
    %90 = arith.mulf %89, %76 : vector<8x64xf32>
    %91 = arith.addf %84, %90 : vector<8x64xf32>
    %c16 = arith.constant 16 : index
    %c0_36 = arith.constant 0 : index
    %92 = vector.load %arg2[%c16, %c0_36] : memref<43x64xf32, #tpu.memory_space<vmem>>, vector<1x64xf32>
    %93 = vector.broadcast %92 : vector<1x64xf32> to vector<8x64xf32>
    %94 = arith.mulf %93, %76 : vector<8x64xf32>
    %95 = arith.addf %87, %94 : vector<8x64xf32>
    %c12 = arith.constant 12 : index
    %c0_37 = arith.constant 0 : index
    %96 = vector.load %arg2[%c12, %c0_37] : memref<43x64xf32, #tpu.memory_space<vmem>>, vector<1x64xf32>
    %97 = vector.broadcast %96 : vector<1x64xf32> to vector<8x64xf32>
    %98 = arith.mulf %97, %81 : vector<8x64xf32>
    %99 = arith.addf %91, %98 : vector<8x64xf32>
    %c15 = arith.constant 15 : index
    %c0_38 = arith.constant 0 : index
    %100 = vector.load %arg2[%c15, %c0_38] : memref<43x64xf32, #tpu.memory_space<vmem>>, vector<1x64xf32>
    %101 = vector.broadcast %100 : vector<1x64xf32> to vector<8x64xf32>
    %102 = arith.mulf %101, %81 : vector<8x64xf32>
    %103 = arith.addf %95, %102 : vector<8x64xf32>
    %c18 = arith.constant 18 : index
    %c0_39 = arith.constant 0 : index
    %104 = vector.load %arg2[%c18, %c0_39] : memref<43x64xf32, #tpu.memory_space<vmem>>, vector<1x64xf32>
    %105 = vector.broadcast %104 : vector<1x64xf32> to vector<8x64xf32>
    %106 = arith.addf %99, %105 : vector<8x64xf32>
    %107 = math.tanh %106 : vector<8x64xf32>
    %c19 = arith.constant 19 : index
    %c0_40 = arith.constant 0 : index
    %108 = vector.load %arg2[%c19, %c0_40] : memref<43x64xf32, #tpu.memory_space<vmem>>, vector<1x64xf32>
    %109 = vector.broadcast %108 : vector<1x64xf32> to vector<8x64xf32>
    %110 = arith.addf %103, %109 : vector<8x64xf32>
    %111 = arith.negf %110 : vector<8x64xf32>
    %112 = math.exp %111 : vector<8x64xf32>
    %cst_41 = arith.constant 1.000000e+00 : f32
    %113 = vector.broadcast %cst_41 : f32 to vector<8x64xf32>
    %114 = arith.addf %113, %112 : vector<8x64xf32>
    %115 = arith.divf %113, %114 : vector<8x64xf32>
    %116 = arith.mulf %107, %115 : vector<8x64xf32>
    %c42_42 = arith.constant 42 : index
    %c0_43 = arith.constant 0 : index
    %117 = vector.load %arg2[%c42_42, %c0_43] : memref<43x64xf32, #tpu.memory_space<vmem>>, vector<1x64xf32>
    %118 = vector.broadcast %117 : vector<1x64xf32> to vector<8x64xf32>
    %119 = arith.mulf %116, %118 : vector<8x64xf32>
    %cst_44 = arith.constant dense<0.000000e+00> : vector<8x64xf32>
    %120 = tpu.matmul %116, %1, %cst_44 {dimension_numbers = #tpu.dot_dimension_numbers<[1], [0], [0], [1], [0, 0, 1, 1], [], []>} : vector<8x64xf32>, vector<64x64xf32>, vector<8x64xf32> -> vector<8x64xf32>
    %121 = arith.addf %119, %120 : vector<8x64xf32>
    %cst_45 = arith.constant dense<0.000000e+00> : vector<8x64xf32>
    %122 = tpu.matmul %121, %1, %cst_45 {dimension_numbers = #tpu.dot_dimension_numbers<[1], [0], [0], [1], [0, 0, 1, 1], [], []>} : vector<8x64xf32>, vector<64x64xf32>, vector<8x64xf32> -> vector<8x64xf32>
    %123 = arith.addf %119, %122 : vector<8x64xf32>
    %124 = arith.addf %121, %123 : vector<8x64xf32>
    %c20 = arith.constant 20 : index
    %c0_46 = arith.constant 0 : index
    %125 = vector.load %arg2[%c20, %c0_46] : memref<43x64xf32, #tpu.memory_space<vmem>>, vector<1x64xf32>
    %126 = vector.broadcast %125 : vector<1x64xf32> to vector<8x64xf32>
    %127 = arith.mulf %124, %126 : vector<8x64xf32>
    %128 = arith.addf %71, %127 : vector<8x64xf32>
    %c21 = arith.constant 21 : index
    %c0_47 = arith.constant 0 : index
    %129 = vector.load %arg2[%c21, %c0_47] : memref<43x64xf32, #tpu.memory_space<vmem>>, vector<1x64xf32>
    %130 = vector.broadcast %129 : vector<1x64xf32> to vector<8x64xf32>
    %131 = arith.addf %128, %130 : vector<8x64xf32>
    %c22 = arith.constant 22 : index
    %c0_48 = arith.constant 0 : index
    %132 = vector.load %arg2[%c22, %c0_48] : memref<43x64xf32, #tpu.memory_space<vmem>>, vector<1x64xf32>
    %133 = vector.broadcast %132 : vector<1x64xf32> to vector<8x64xf32>
    %134 = arith.mulf %133, %11 : vector<8x64xf32>
    %c23 = arith.constant 23 : index
    %c0_49 = arith.constant 0 : index
    %135 = vector.load %arg2[%c23, %c0_49] : memref<43x64xf32, #tpu.memory_space<vmem>>, vector<1x64xf32>
    %136 = vector.broadcast %135 : vector<1x64xf32> to vector<8x64xf32>
    %137 = arith.mulf %136, %56 : vector<8x64xf32>
    %138 = arith.addf %134, %137 : vector<8x64xf32>
    %c24 = arith.constant 24 : index
    %c0_50 = arith.constant 0 : index
    %139 = vector.load %arg2[%c24, %c0_50] : memref<43x64xf32, #tpu.memory_space<vmem>>, vector<1x64xf32>
    %140 = vector.broadcast %139 : vector<1x64xf32> to vector<8x64xf32>
    %141 = arith.mulf %140, %116 : vector<8x64xf32>
    %142 = arith.addf %138, %141 : vector<8x64xf32>
    %c25 = arith.constant 25 : index
    %c0_51 = arith.constant 0 : index
    %143 = vector.load %arg2[%c25, %c0_51] : memref<43x64xf32, #tpu.memory_space<vmem>>, vector<1x64xf32>
    %144 = vector.broadcast %143 : vector<1x64xf32> to vector<8x64xf32>
    %145 = arith.mulf %144, %131 : vector<8x64xf32>
    %146 = arith.addf %142, %145 : vector<8x64xf32>
    %c26 = arith.constant 26 : index
    %c0_52 = arith.constant 0 : index
    %147 = vector.load %arg2[%c26, %c0_52] : memref<43x64xf32, #tpu.memory_space<vmem>>, vector<1x64xf32>
    %148 = vector.broadcast %147 : vector<1x64xf32> to vector<8x64xf32>
    %149 = arith.addf %146, %148 : vector<8x64xf32>
    %c27 = arith.constant 27 : index
    %c0_53 = arith.constant 0 : index
    %150 = vector.load %arg2[%c27, %c0_53] : memref<43x64xf32, #tpu.memory_space<vmem>>, vector<1x64xf32>
    %151 = vector.broadcast %150 : vector<1x64xf32> to vector<8x64xf32>
    %152 = arith.mulf %149, %151 : vector<8x64xf32>
    %c28 = arith.constant 28 : index
    %c0_54 = arith.constant 0 : index
    %153 = vector.load %arg2[%c28, %c0_54] : memref<43x64xf32, #tpu.memory_space<vmem>>, vector<1x64xf32>
    %154 = vector.broadcast %153 : vector<1x64xf32> to vector<8x64xf32>
    %155 = arith.addf %152, %154 : vector<8x64xf32>
    %cst_55 = arith.constant 5.000000e-01 : f32
    %156 = vector.broadcast %cst_55 : f32 to vector<8x64xf32>
    %157 = arith.mulf %156, %155 : vector<8x64xf32>
    %cst_56 = arith.constant 4.471500e-02 : f32
    %158 = vector.broadcast %cst_56 : f32 to vector<8x64xf32>
    %159 = arith.mulf %158, %155 : vector<8x64xf32>
    %160 = arith.mulf %159, %155 : vector<8x64xf32>
    %161 = arith.mulf %160, %155 : vector<8x64xf32>
    %162 = arith.addf %155, %161 : vector<8x64xf32>
    %cst_57 = arith.constant 0.797884583 : f32
    %163 = vector.broadcast %cst_57 : f32 to vector<8x64xf32>
    %164 = arith.mulf %163, %162 : vector<8x64xf32>
    %165 = math.tanh %164 : vector<8x64xf32>
    %cst_58 = arith.constant 1.000000e+00 : f32
    %166 = vector.broadcast %cst_58 : f32 to vector<8x64xf32>
    %167 = arith.addf %166, %165 : vector<8x64xf32>
    %168 = arith.mulf %157, %167 : vector<8x64xf32>
    %c29 = arith.constant 29 : index
    %c0_59 = arith.constant 0 : index
    %169 = vector.load %arg2[%c29, %c0_59] : memref<43x64xf32, #tpu.memory_space<vmem>>, vector<1x64xf32>
    %170 = vector.broadcast %169 : vector<1x64xf32> to vector<8x64xf32>
    %171 = arith.mulf %168, %170 : vector<8x64xf32>
    %c30 = arith.constant 30 : index
    %c0_60 = arith.constant 0 : index
    %172 = vector.load %arg2[%c30, %c0_60] : memref<43x64xf32, #tpu.memory_space<vmem>>, vector<1x64xf32>
    %173 = vector.broadcast %172 : vector<1x64xf32> to vector<8x64xf32>
    %174 = arith.addf %171, %173 : vector<8x64xf32>
    %c31 = arith.constant 31 : index
    %c0_61 = arith.constant 0 : index
    %175 = vector.load %arg2[%c31, %c0_61] : memref<43x64xf32, #tpu.memory_space<vmem>>, vector<1x64xf32>
    %176 = vector.broadcast %175 : vector<1x64xf32> to vector<8x64xf32>
    %177 = arith.mulf %174, %176 : vector<8x64xf32>
    %c32 = arith.constant 32 : index
    %c0_62 = arith.constant 0 : index
    %178 = vector.load %arg2[%c32, %c0_62] : memref<43x64xf32, #tpu.memory_space<vmem>>, vector<1x64xf32>
    %179 = vector.broadcast %178 : vector<1x64xf32> to vector<8x64xf32>
    %180 = arith.addf %177, %179 : vector<8x64xf32>
    %cst_63 = arith.constant 5.000000e-01 : f32
    %181 = vector.broadcast %cst_63 : f32 to vector<8x64xf32>
    %182 = arith.mulf %181, %180 : vector<8x64xf32>
    %cst_64 = arith.constant 4.471500e-02 : f32
    %183 = vector.broadcast %cst_64 : f32 to vector<8x64xf32>
    %184 = arith.mulf %183, %180 : vector<8x64xf32>
    %185 = arith.mulf %184, %180 : vector<8x64xf32>
    %186 = arith.mulf %185, %180 : vector<8x64xf32>
    %187 = arith.addf %180, %186 : vector<8x64xf32>
    %cst_65 = arith.constant 0.797884583 : f32
    %188 = vector.broadcast %cst_65 : f32 to vector<8x64xf32>
    %189 = arith.mulf %188, %187 : vector<8x64xf32>
    %190 = math.tanh %189 : vector<8x64xf32>
    %cst_66 = arith.constant 1.000000e+00 : f32
    %191 = vector.broadcast %cst_66 : f32 to vector<8x64xf32>
    %192 = arith.addf %191, %190 : vector<8x64xf32>
    %193 = arith.mulf %182, %192 : vector<8x64xf32>
    %cst_67 = arith.constant dense<0.000000e+00> : vector<8x64xf32>
    %194 = tpu.matmul %193, %3, %cst_67 {dimension_numbers = #tpu.dot_dimension_numbers<[1], [0], [0], [1], [0, 0, 1, 1], [], []>} : vector<8x64xf32>, vector<64x64xf32>, vector<8x64xf32> -> vector<8x64xf32>
    %c33 = arith.constant 33 : index
    %c0_68 = arith.constant 0 : index
    %195 = vector.load %arg2[%c33, %c0_68] : memref<43x64xf32, #tpu.memory_space<vmem>>, vector<1x64xf32>
    %196 = vector.broadcast %195 : vector<1x64xf32> to vector<8x64xf32>
    %197 = arith.addf %194, %196 : vector<8x64xf32>
    %198 = arith.addf %168, %197 : vector<8x64xf32>
    %cst_69 = arith.constant 5.000000e-01 : f32
    %199 = vector.broadcast %cst_69 : f32 to vector<8x64xf32>
    %200 = arith.mulf %199, %198 : vector<8x64xf32>
    %cst_70 = arith.constant 4.471500e-02 : f32
    %201 = vector.broadcast %cst_70 : f32 to vector<8x64xf32>
    %202 = arith.mulf %201, %198 : vector<8x64xf32>
    %203 = arith.mulf %202, %198 : vector<8x64xf32>
    %204 = arith.mulf %203, %198 : vector<8x64xf32>
    %205 = arith.addf %198, %204 : vector<8x64xf32>
    %cst_71 = arith.constant 0.797884583 : f32
    %206 = vector.broadcast %cst_71 : f32 to vector<8x64xf32>
    %207 = arith.mulf %206, %205 : vector<8x64xf32>
    %208 = math.tanh %207 : vector<8x64xf32>
    %cst_72 = arith.constant 1.000000e+00 : f32
    %209 = vector.broadcast %cst_72 : f32 to vector<8x64xf32>
    %210 = arith.addf %209, %208 : vector<8x64xf32>
    %211 = arith.mulf %200, %210 : vector<8x64xf32>
    %c0_73 = arith.constant 0 : index
    %c0_74 = arith.constant 0 : index
    %212 = vector.load %arg4[%c0_73, %c0_74] : memref<8x32xf32, #tpu.memory_space<vmem>>, vector<8x32xf32>
    %c0_75 = arith.constant 0 : index
    %c0_76 = arith.constant 0 : index
    %213 = vector.load %arg5[%c0_75, %c0_76] : memref<8x1xf32, #tpu.memory_space<vmem>>, vector<8x1xf32>
    %214 = vector.extract_strided_slice %211 {offsets = [0, 0], sizes = [8, 16], strides = [1, 1]} : vector<8x64xf32> to vector<8x16xf32>
    %215 = vector.extract_strided_slice %211 {offsets = [0, 16], sizes = [8, 16], strides = [1, 1]} : vector<8x64xf32> to vector<8x16xf32>
    %216 = vector.extract_strided_slice %211 {offsets = [0, 32], sizes = [8, 16], strides = [1, 1]} : vector<8x64xf32> to vector<8x16xf32>
    %217 = vector.extract_strided_slice %211 {offsets = [0, 48], sizes = [8, 16], strides = [1, 1]} : vector<8x64xf32> to vector<8x16xf32>
    %218 = tpu.concatenate %214, %215, %216, %217 in 0 : vector<8x16xf32>, vector<8x16xf32>, vector<8x16xf32>, vector<8x16xf32> -> vector<32x16xf32>
    %219 = vector.extract_strided_slice %212 {offsets = [0, 0], sizes = [4, 32], strides = [1, 1]} : vector<8x32xf32> to vector<4x32xf32>
    %cst_77 = arith.constant dense<0.000000e+00> : vector<4x16xf32>
    %220 = tpu.matmul %219, %218, %cst_77 {dimension_numbers = #tpu.dot_dimension_numbers<[1], [0], [0], [1], [0, 0, 1, 1], [], []>} : vector<4x32xf32>, vector<32x16xf32>, vector<4x16xf32> -> vector<4x16xf32>
    %221 = vector.extract_strided_slice %213 {offsets = [0, 0], sizes = [4, 1], strides = [1, 1]} : vector<8x1xf32> to vector<4x1xf32>
    %222 = vector.broadcast %221 : vector<4x1xf32> to vector<4x16xf32>
    %223 = arith.addf %220, %222 : vector<4x16xf32>
    %224 = math.tanh %223 : vector<4x16xf32>
    %c0_78 = arith.constant 0 : index
    %c0_79 = arith.constant 0 : index
    %225 = vector.load %arg1[%c0_78, %c0_79] : memref<8x64xf32, #tpu.memory_space<vmem>>, vector<8x64xf32>
    %c1_i32_80 = arith.constant 1 : i32
    %226 = vector.broadcast %c1_i32_80 : i32 to vector<8x64xi32>
    %227 = arith.cmpi sge, %4, %226 : vector<8x64xi32>
    %c1_i32_81 = arith.constant 1 : i32
    %228 = tpu.dynamic_rotate %225 by %c1_i32_81 dim 0 : vector<8x64xf32>, i32 -> vector<8x64xf32>
    %cst_82 = arith.constant 0.000000e+00 : f32
    %229 = vector.broadcast %cst_82 : f32 to vector<8x64xf32>
    %230 = arith.select %227, %228, %229 : vector<8x64xi1>, vector<8x64xf32>
    %c2_i32_83 = arith.constant 2 : i32
    %231 = vector.broadcast %c2_i32_83 : i32 to vector<8x64xi32>
    %232 = arith.cmpi sge, %4, %231 : vector<8x64xi32>
    %c2_i32_84 = arith.constant 2 : i32
    %233 = tpu.dynamic_rotate %225 by %c2_i32_84 dim 0 : vector<8x64xf32>, i32 -> vector<8x64xf32>
    %cst_85 = arith.constant 0.000000e+00 : f32
    %234 = vector.broadcast %cst_85 : f32 to vector<8x64xf32>
    %235 = arith.select %232, %233, %234 : vector<8x64xi1>, vector<8x64xf32>
    %c36 = arith.constant 36 : index
    %c0_86 = arith.constant 0 : index
    %236 = vector.load %arg2[%c36, %c0_86] : memref<43x64xf32, #tpu.memory_space<vmem>>, vector<1x64xf32>
    %237 = vector.broadcast %236 : vector<1x64xf32> to vector<8x64xf32>
    %238 = arith.mulf %237, %225 : vector<8x64xf32>
    %c39 = arith.constant 39 : index
    %c0_87 = arith.constant 0 : index
    %239 = vector.load %arg2[%c39, %c0_87] : memref<43x64xf32, #tpu.memory_space<vmem>>, vector<1x64xf32>
    %240 = vector.broadcast %239 : vector<1x64xf32> to vector<8x64xf32>
    %241 = arith.mulf %240, %225 : vector<8x64xf32>
    %c35 = arith.constant 35 : index
    %c0_88 = arith.constant 0 : index
    %242 = vector.load %arg2[%c35, %c0_88] : memref<43x64xf32, #tpu.memory_space<vmem>>, vector<1x64xf32>
    %243 = vector.broadcast %242 : vector<1x64xf32> to vector<8x64xf32>
    %244 = arith.mulf %243, %230 : vector<8x64xf32>
    %245 = arith.addf %238, %244 : vector<8x64xf32>
    %c38 = arith.constant 38 : index
    %c0_89 = arith.constant 0 : index
    %246 = vector.load %arg2[%c38, %c0_89] : memref<43x64xf32, #tpu.memory_space<vmem>>, vector<1x64xf32>
    %247 = vector.broadcast %246 : vector<1x64xf32> to vector<8x64xf32>
    %248 = arith.mulf %247, %230 : vector<8x64xf32>
    %249 = arith.addf %241, %248 : vector<8x64xf32>
    %c34 = arith.constant 34 : index
    %c0_90 = arith.constant 0 : index
    %250 = vector.load %arg2[%c34, %c0_90] : memref<43x64xf32, #tpu.memory_space<vmem>>, vector<1x64xf32>
    %251 = vector.broadcast %250 : vector<1x64xf32> to vector<8x64xf32>
    %252 = arith.mulf %251, %235 : vector<8x64xf32>
    %253 = arith.addf %245, %252 : vector<8x64xf32>
    %c37 = arith.constant 37 : index
    %c0_91 = arith.constant 0 : index
    %254 = vector.load %arg2[%c37, %c0_91] : memref<43x64xf32, #tpu.memory_space<vmem>>, vector<1x64xf32>
    %255 = vector.broadcast %254 : vector<1x64xf32> to vector<8x64xf32>
    %256 = arith.mulf %255, %235 : vector<8x64xf32>
    %257 = arith.addf %249, %256 : vector<8x64xf32>
    %c40 = arith.constant 40 : index
    %c0_92 = arith.constant 0 : index
    %258 = vector.load %arg2[%c40, %c0_92] : memref<43x64xf32, #tpu.memory_space<vmem>>, vector<1x64xf32>
    %259 = vector.broadcast %258 : vector<1x64xf32> to vector<8x64xf32>
    %260 = arith.addf %253, %259 : vector<8x64xf32>
    %261 = math.tanh %260 : vector<8x64xf32>
    %c41 = arith.constant 41 : index
    %c0_93 = arith.constant 0 : index
    %262 = vector.load %arg2[%c41, %c0_93] : memref<43x64xf32, #tpu.memory_space<vmem>>, vector<1x64xf32>
    %263 = vector.broadcast %262 : vector<1x64xf32> to vector<8x64xf32>
    %264 = arith.addf %257, %263 : vector<8x64xf32>
    %265 = arith.negf %264 : vector<8x64xf32>
    %266 = math.exp %265 : vector<8x64xf32>
    %cst_94 = arith.constant 1.000000e+00 : f32
    %267 = vector.broadcast %cst_94 : f32 to vector<8x64xf32>
    %268 = arith.addf %267, %266 : vector<8x64xf32>
    %269 = arith.divf %267, %268 : vector<8x64xf32>
    %270 = arith.mulf %261, %269 : vector<8x64xf32>
    %271 = arith.addf %225, %270 : vector<8x64xf32>
    %272 = vector.extract_strided_slice %271 {offsets = [0, 0], sizes = [8, 16], strides = [1, 1]} : vector<8x64xf32> to vector<8x16xf32>
    %273 = vector.extract_strided_slice %271 {offsets = [0, 16], sizes = [8, 16], strides = [1, 1]} : vector<8x64xf32> to vector<8x16xf32>
    %274 = vector.extract_strided_slice %271 {offsets = [0, 32], sizes = [8, 16], strides = [1, 1]} : vector<8x64xf32> to vector<8x16xf32>
    %275 = vector.extract_strided_slice %271 {offsets = [0, 48], sizes = [8, 16], strides = [1, 1]} : vector<8x64xf32> to vector<8x16xf32>
    %276 = tpu.concatenate %272, %273, %274, %275 in 0 : vector<8x16xf32>, vector<8x16xf32>, vector<8x16xf32>, vector<8x16xf32> -> vector<32x16xf32>
    %277 = vector.extract_strided_slice %212 {offsets = [4, 0], sizes = [4, 32], strides = [1, 1]} : vector<8x32xf32> to vector<4x32xf32>
    %cst_95 = arith.constant dense<0.000000e+00> : vector<4x16xf32>
    %278 = tpu.matmul %277, %276, %cst_95 {dimension_numbers = #tpu.dot_dimension_numbers<[1], [0], [0], [1], [0, 0, 1, 1], [], []>} : vector<4x32xf32>, vector<32x16xf32>, vector<4x16xf32> -> vector<4x16xf32>
    %279 = vector.extract_strided_slice %213 {offsets = [4, 0], sizes = [4, 1], strides = [1, 1]} : vector<8x1xf32> to vector<4x1xf32>
    %280 = vector.broadcast %279 : vector<4x1xf32> to vector<4x16xf32>
    %281 = arith.addf %278, %280 : vector<4x16xf32>
    %282 = arith.negf %281 : vector<4x16xf32>
    %283 = math.exp %282 : vector<4x16xf32>
    %cst_96 = arith.constant 1.000000e+00 : f32
    %284 = vector.broadcast %cst_96 : f32 to vector<4x16xf32>
    %285 = arith.addf %284, %283 : vector<4x16xf32>
    %286 = arith.divf %284, %285 : vector<4x16xf32>
    %287 = arith.mulf %224, %286 : vector<4x16xf32>
    %288 = tpu.concatenate %287, %224, %286 in 0 : vector<4x16xf32>, vector<4x16xf32>, vector<4x16xf32> -> vector<12x16xf32>
    %c0_97 = arith.constant 0 : index
    %c0_98 = arith.constant 0 : index
    %289 = vector.load %arg6[%c0_97, %c0_98] : memref<12x16xf32, #tpu.memory_space<vmem>>, vector<12x16xf32>
    tpu.vector_store %arg6[%c0_97, %c0_98], %288 {strides = array<i32>} : memref<12x16xf32, #tpu.memory_space<vmem>>, vector<12x16xf32>,
    return
  }
}

</mosaic_0001>

<llo_original>
// kernel: hetero_mtgnn_forward.1
$region0: #{hetero_mtgnn_forward.1}
  #allocation0 [shape = 'u32[]', space=smem, size = 0x4, offset = 0x4, fixed_abs, tag = 'smem constant byte address 0x4 - core index']
  #allocation1 [shape = 'u32[144,128]{1,0:T(1,128)}', space=vmem, size = 0x12000, scoped, tag = 'internal scratch']
  %s0 = inlined_call_operand.vmem [shape: f32[8,64], index: 0, kind: input, shape index: {}]
  %s1 = inlined_call_operand.vmem [shape: f32[8,64], index: 1, kind: input, shape index: {}]
  %s2 = inlined_call_operand.vmem [shape: f32[43,64], index: 2, kind: input, shape index: {}]
  %s3 = inlined_call_operand.vmem [shape: f32[2,64,64], index: 3, kind: input, shape index: {}]
  %s4 = inlined_call_operand.vmem [shape: f32[8,32], index: 4, kind: input, shape index: {}]
  %s5 = inlined_call_operand.vmem [shape: f32[8,1], index: 5, kind: input, shape index: {}]
  %s6 = inlined_call_operand.vmem [shape: f32[12,16], index: 6, kind: output, shape index: {}]
  %s7 = sld [smem:[#allocation0]]
  $region34: #{hetero_mtgnn_forward.1} parent=0
    _
  %s9 = ssub.s32 1, %s7
  %s10 = scalar_select 0, %s9, %s7
  // Predicated region
  $region2: #{hetero_mtgnn_forward.1} parent=0 // pred_check
    _
  $region3: #{hetero_mtgnn_forward.1} parent=0 // pred_check_branch
    %12 = sbr.rel (0) target = $region5
  $region4: #{hetero_mtgnn_forward.1} parent=0 // pred_region
    _
  $region5: #{hetero_mtgnn_forward.1} parent=0 // pred_fallthru
    _
  // Predicated region
  $region6: #{hetero_mtgnn_forward.1} parent=0 // pred_check
    _
  $region7: #{hetero_mtgnn_forward.1} parent=0 // pred_check_branch
    %14 = sbr.rel (0) target = $region9
  $region8: #{hetero_mtgnn_forward.1} parent=0 // pred_region
    _
  $region9: #{hetero_mtgnn_forward.1} parent=0 // pred_fallthru
    _
  // Predicated region
  $region10: #{hetero_mtgnn_forward.1} parent=0 // pred_check
    _
  $region11: #{hetero_mtgnn_forward.1} parent=0 // pred_check_branch
    %16 = sbr.rel (0) target = $region13
  $region12: #{hetero_mtgnn_forward.1} parent=0 // pred_region
    _
  $region13: #{hetero_mtgnn_forward.1} parent=0 // pred_fallthru
    _
  // Predicated region
  $region14: #{hetero_mtgnn_forward.1} parent=0 // pred_check
    _
  $region15: #{hetero_mtgnn_forward.1} parent=0 // pred_check_branch
    %18 = sbr.rel (0) target = $region17
  $region16: #{hetero_mtgnn_forward.1} parent=0 // pred_region
    _
  $region17: #{hetero_mtgnn_forward.1} parent=0 // pred_fallthru
    _
  // Predicated region
  $region18: #{hetero_mtgnn_forward.1} parent=0 // pred_check
    _
  $region19: #{hetero_mtgnn_forward.1} parent=0 // pred_check_branch
    %20 = sbr.rel (0) target = $region21
  $region20: #{hetero_mtgnn_forward.1} parent=0 // pred_region
    _
  $region21: #{hetero_mtgnn_forward.1} parent=0 // pred_fallthru
    _
  // Predicated region
  $region22: #{hetero_mtgnn_forward.1} parent=0 // pred_check
    _
  $region23: #{hetero_mtgnn_forward.1} parent=0 // pred_check_branch
    %22 = sbr.rel (0) target = $region25
  $region24: #{hetero_mtgnn_forward.1} parent=0 // pred_region
    _
  $region25: #{hetero_mtgnn_forward.1} parent=0 // pred_fallthru
    _
  %v23 = vld [vmem:[%s3] sm:$0xff]
  %v24 = vld [vmem:[%s3 + $0x8] sm:$0xff]
  %v25 = vld [vmem:[%s3 + $0x10] sm:$0xff]
  %v26 = vld [vmem:[%s3 + $0x18] sm:$0xff]
  %v27 = vld [vmem:[%s3 + $0x20] sm:$0xff]
  %v28 = vld [vmem:[%s3 + $0x28] sm:$0xff]
  %v29 = vld [vmem:[%s3 + $0x30] sm:$0xff]
  %v30 = vld [vmem:[%s3 + $0x38] sm:$0xff]
  %s31 = scalar_lea.vmem %s3, 64
  %v32 = vld [vmem:[%s31] sm:$0xff]
  %v33 = vld [vmem:[%s31 + $0x8] sm:$0xff]
  %v34 = vld [vmem:[%s31 + $0x10] sm:$0xff]
  %v35 = vld [vmem:[%s31 + $0x18] sm:$0xff]
  %v36 = vld [vmem:[%s31 + $0x20] sm:$0xff]
  %v37 = vld [vmem:[%s31 + $0x28] sm:$0xff]
  %v38 = vld [vmem:[%s31 + $0x30] sm:$0xff]
  %v39 = vld [vmem:[%s31 + $0x38] sm:$0xff]
  %v40 = vlaneseq
  %v41 = vshrl.u32 %v40, 7
  %v42 = vld [vmem:[%s0] sm:$0xff]
  %v43 = vld [vmem:[%s2] sm:$0x1]
  %v44 = vlaneseq
  %v45 = vshrl.u32 %v44, 7
  %v46 = vsub.s32 0, %v45
  %v47 = vrot.slane %v43, %v46
  %v48 = vmul.f32 %v42, %v47
  %v49 = vld [vmem:[%s2 + $0x1] sm:$0x1]
  %v50 = vlaneseq
  %v51 = vshrl.u32 %v50, 7
  %v52 = vsub.s32 0, %v51
  %v53 = vrot.slane %v49, %v52
  %v54 = vadd.f32 %v48, %v53
  %vm55 = vcmp.ge.s32.totalorder %v41, 1
  %v56 = vrot.slane %v54, 7
  %v57 = vsel %vm55, %v56, 0.0
  %vm58 = vcmp.ge.s32.totalorder %v41, 2
  %v59 = vrot.slane %v54, 6
  %v60 = vsel %vm58, %v59, 0.0
  %v61 = vld [vmem:[%s2 + $0x4] sm:$0x1]
  %v62 = vlaneseq
  %v63 = vshrl.u32 %v62, 7
  %v64 = vsub.s32 0, %v63
  %v65 = vrot.slane %v61, %v64
  %v66 = vmul.f32 %v65, %v54
  %v67 = vld [vmem:[%s2 + $0x7] sm:$0x1]
  %v68 = vlaneseq
  %v69 = vshrl.u32 %v68, 7
  %v70 = vsub.s32 0, %v69
  %v71 = vrot.slane %v67, %v70
  %v72 = vmul.f32 %v71, %v54
  %v73 = vld [vmem:[%s2 + $0x3] sm:$0x1]
  %v74 = vlaneseq
  %v75 = vshrl.u32 %v74, 7
  %v76 = vsub.s32 0, %v75
  %v77 = vrot.slane %v73, %v76
  %v78 = vmul.f32 %v77, %v57
  %v79 = vadd.f32 %v66, %v78
  %v80 = vld [vmem:[%s2 + $0x6] sm:$0x1]
  %v81 = vlaneseq
  %v82 = vshrl.u32 %v81, 7
  %v83 = vsub.s32 0, %v82
  %v84 = vrot.slane %v80, %v83
  %v85 = vmul.f32 %v84, %v57
  %v86 = vadd.f32 %v72, %v85
  %v87 = vld [vmem:[%s2 + $0x2] sm:$0x1]
  %v88 = vlaneseq
  %v89 = vshrl.u32 %v88, 7
  %v90 = vsub.s32 0, %v89
  %v91 = vrot.slane %v87, %v90
  %v92 = vmul.f32 %v91, %v60
  %v93 = vadd.f32 %v79, %v92
  %v94 = vld [vmem:[%s2 + $0x5] sm:$0x1]
  %v95 = vlaneseq
  %v96 = vshrl.u32 %v95, 7
  %v97 = vsub.s32 0, %v96
  %v98 = vrot.slane %v94, %v97
  %v99 = vmul.f32 %v98, %v60
  %v100 = vadd.f32 %v86, %v99
  %v101 = vld [vmem:[%s2 + $0x8] sm:$0x1]
  %v102 = vlaneseq
  %v103 = vshrl.u32 %v102, 7
  %v104 = vsub.s32 0, %v103
  %v105 = vrot.slane %v101, %v104
  %v106 = vadd.f32 %v93, %v105
  %v107 = vtanh.pop %v106
  %v108 = vld [vmem:[%s2 + $0x9] sm:$0x1]
  %v109 = vlaneseq
  %v110 = vshrl.u32 %v109, 7
  %v111 = vsub.s32 0, %v110
  %v112 = vrot.slane %v108, %v111
  %v113 = vadd.f32 %v100, %v112
  %v114 = vxor.u32 %v113, 2147483648
  %v115 = vmul.f32 %v114, 1.442695
  %v116 = vpow.pop %v115
  %v117 = vadd.f32 %v116, 1.0
  %v118 = vrcp.pop %v117
  %v119 = vmul.f32 1.0, %v118
  %v120 = vmul.f32 %v107, %v119
  %v121 = vld [vmem:[%s2 + $0x2a] sm:$0x1]
  %v122 = vlaneseq
  %v123 = vshrl.u32 %v122, 7
  %v124 = vsub.s32 0, %v123
  %v125 = vrot.slane %v121, %v124
  %v126 = vmul.f32 %v120, %v125
  %vm127 = vcmask 523264
  %v129 = vsel %vm127, %v120, 0
  %131 = vmatprep.subr.mxu0 0.0
  %132 = vmatpush1.msra.mxu0 %v23
  %133 = vmatprep.subr.mxu0 0.0
  %134 = vmatpush1.msra.mxu0 %v24
  %135 = vmatprep.subr.mxu0 0.0
  %136 = vmatpush1.msra.mxu0 %v25
  %137 = vmatprep.subr.mxu0 0.0
  %138 = vmatpush1.msra.mxu0 %v26
  %139 = vmatprep.subr.mxu0 0.0
  %140 = vmatpush1.msra.mxu0 %v27
  %141 = vmatprep.subr.mxu0 0.0
  %142 = vmatpush1.msra.mxu0 %v28
  %143 = vmatprep.subr.mxu0 0.0
  %144 = vmatpush1.msra.mxu0 %v29
  %145 = vmatprep.subr.mxu0 0.0
  %146 = vmatpush1.msra.mxu0 %v30
  %147 = vmatprep.subr.mxu0 0.0
  %148 = vmatpush1.msra.mxu0 0.0
  %149 = vmatprep.subr.mxu0 0.0
  %150 = vmatpush1.msra.mxu0 0.0
  %151 = vmatprep.subr.mxu0 0.0
  %152 = vmatpush1.msra.mxu0 0.0
  %153 = vmatprep.subr.mxu0 0.0
  %154 = vmatpush1.msra.mxu0 0.0
  %155 = vmatprep.subr.mxu0 0.0
  %156 = vmatpush1.msra.mxu0 0.0
  %157 = vmatprep.subr.mxu0 0.0
  %158 = vmatpush1.msra.mxu0 0.0
  %159 = vmatprep.subr.mxu0 0.0
  %160 = vmatpush1.msra.mxu0 0.0
  %161 = vmatprep.subr.mxu0 0.0
  %162 = vmatpush1.msra.mxu0 0.0
  %163 = vmatprep.subr.mxu0 0.0
  %164 = vmatpush1.msra.mxu0 0.0
  %165 = vmatprep.subr.mxu0 0.0
  %166 = vmatpush1.msra.mxu0 0.0
  %167 = vmatprep.subr.mxu0 0.0
  %168 = vmatpush1.msra.mxu0 0.0
  %169 = vmatprep.subr.mxu0 0.0
  %170 = vmatpush1.msra.mxu0 0.0
  %171 = vmatprep.subr.mxu0 0.0
  %172 = vmatpush1.msra.mxu0 0.0
  %173 = vmatprep.subr.mxu0 0.0
  %174 = vmatpush1.msra.mxu0 0.0
  %175 = vmatprep.subr.mxu0 0.0
  %176 = vmatpush1.msra.mxu0 0.0
  %177 = vmatprep.subr.mxu0 0.0
  %178 = vmatpush1.msra.mxu0 0.0
  %179 = vmatprep.subr.mxu0 0.0
  %180 = vmatpush1.msra.mxu0 0.0
  %181 = vmatprep.subr.mxu0 0.0
  %182 = vmatpush1.msra.mxu0 0.0
  %183 = vmatprep.subr.mxu0 0.0
  %184 = vmatpush1.msra.mxu0 0.0
  %185 = vmatprep.subr.mxu0 0.0
  %186 = vmatpush1.msra.mxu0 0.0
  %187 = vmatprep.subr.mxu0 0.0
  %188 = vmatpush1.msra.mxu0 0.0
  %189 = vmatprep.subr.mxu0 0.0
  %190 = vmatpush1.msra.mxu0 0.0
  %191 = vmatprep.subr.mxu0 0.0
  %192 = vmatpush1.msra.mxu0 0.0
  %193 = vmatprep.subr.mxu0 0.0
  %194 = vmatpush1.msra.mxu0 0.0
  %195 = vmatprep.mubr.f32.mxu0 0.0
  %196 = vmatmul.mubr.f32.gmra.mrb[0].mxu0 %v129
  %v197 = vpop.f32.mrb[0].mxu0
  %v198 = vadd.f32 0.0, %v197
  %v199 = vpop.f32.mrb[0].mxu0
  %200 = vdwg.mxu0
  %v201 = vadd.f32 %v126, %v198
  %v203 = vsel %vm127, %v201, 0
  %205 = vmatprep.subr.mxu0 0.0
  %206 = vmatpush1.msra.mxu0 %v23
  %207 = vmatprep.subr.mxu0 0.0
  %208 = vmatpush1.msra.mxu0 %v24
  %209 = vmatprep.subr.mxu0 0.0
  %210 = vmatpush1.msra.mxu0 %v25
  %211 = vmatprep.subr.mxu0 0.0
  %212 = vmatpush1.msra.mxu0 %v26
  %213 = vmatprep.subr.mxu0 0.0
  %214 = vmatpush1.msra.mxu0 %v27
  %215 = vmatprep.subr.mxu0 0.0
  %216 = vmatpush1.msra.mxu0 %v28
  %217 = vmatprep.subr.mxu0 0.0
  %218 = vmatpush1.msra.mxu0 %v29
  %219 = vmatprep.subr.mxu0 0.0
  %220 = vmatpush1.msra.mxu0 %v30
  %221 = vmatprep.subr.mxu0 0.0
  %222 = vmatpush1.msra.mxu0 0.0
  %223 = vmatprep.subr.mxu0 0.0
  %224 = vmatpush1.msra.mxu0 0.0
  %225 = vmatprep.subr.mxu0 0.0
  %226 = vmatpush1.msra.mxu0 0.0
  %227 = vmatprep.subr.mxu0 0.0
  %228 = vmatpush1.msra.mxu0 0.0
  %229 = vmatprep.subr.mxu0 0.0
  %230 = vmatpush1.msra.mxu0 0.0
  %231 = vmatprep.subr.mxu0 0.0
  %232 = vmatpush1.msra.mxu0 0.0
  %233 = vmatprep.subr.mxu0 0.0
  %234 = vmatpush1.msra.mxu0 0.0
  %235 = vmatprep.subr.mxu0 0.0
  %236 = vmatpush1.msra.mxu0 0.0
  %237 = vmatprep.subr.mxu0 0.0
  %238 = vmatpush1.msra.mxu0 0.0
  %239 = vmatprep.subr.mxu0 0.0
  %240 = vmatpush1.msra.mxu0 0.0
  %241 = vmatprep.subr.mxu0 0.0
  %242 = vmatpush1.msra.mxu0 0.0
  %243 = vmatprep.subr.mxu0 0.0
  %244 = vmatpush1.msra.mxu0 0.0
  %245 = vmatprep.subr.mxu0 0.0
  %246 = vmatpush1.msra.mxu0 0.0
  %247 = vmatprep.subr.mxu0 0.0
  %248 = vmatpush1.msra.mxu0 0.0
  %249 = vmatprep.subr.mxu0 0.0
  %250 = vmatpush1.msra.mxu0 0.0
  %251 = vmatprep.subr.mxu0 0.0
  %252 = vmatpush1.msra.mxu0 0.0
  %253 = vmatprep.subr.mxu0 0.0
  %254 = vmatpush1.msra.mxu0 0.0
  %255 = vmatprep.subr.mxu0 0.0
  %256 = vmatpush1.msra.mxu0 0.0
  %257 = vmatprep.subr.mxu0 0.0
  %258 = vmatpush1.msra.mxu0 0.0
  %259 = vmatprep.subr.mxu0 0.0
  %260 = vmatpush1.msra.mxu0 0.0
  %261 = vmatprep.subr.mxu0 0.0
  %262 = vmatpush1.msra.mxu0 0.0
  %263 = vmatprep.subr.mxu0 0.0
  %264 = vmatpush1.msra.mxu0 0.0
  %265 = vmatprep.subr.mxu0 0.0
  %266 = vmatpush1.msra.mxu0 0.0
  %267 = vmatprep.subr.mxu0 0.0
  %268 = vmatpush1.msra.mxu0 0.0
  %269 = vmatprep.mubr.f32.mxu0 0.0
  %270 = vmatmul.mubr.f32.gmra.mrb[0].mxu0 %v203
  %v271 = vpop.f32.mrb[0].mxu0
  %v272 = vadd.f32 0.0, %v271
  %v273 = vpop.f32.mrb[0].mxu0
  %274 = vdwg.mxu0
  %v275 = vadd.f32 %v126, %v272
  %v276 = vadd.f32 %v201, %v275
  %v277 = vld [vmem:[%s2 + $0xa] sm:$0x1]
  %v278 = vlaneseq
  %v279 = vshrl.u32 %v278, 7
  %v280 = vsub.s32 0, %v279
  %v281 = vrot.slane %v277, %v280
  %v282 = vmul.f32 %v276, %v281
  %v283 = vadd.f32 %v54, %v282
  %v284 = vld [vmem:[%s2 + $0xb] sm:$0x1]
  %v285 = vlaneseq
  %v286 = vshrl.u32 %v285, 7
  %v287 = vsub.s32 0, %v286
  %v288 = vrot.slane %v284, %v287
  %v289 = vadd.f32 %v283, %v288
  %v290 = vrot.slane %v289, 7
  %v291 = vsel %vm55, %v290, 0.0
  %v292 = vrot.slane %v289, 6
  %v293 = vsel %vm58, %v292, 0.0
  %v294 = vld [vmem:[%s2 + $0xe] sm:$0x1]
  %v295 = vlaneseq
  %v296 = vshrl.u32 %v295, 7
  %v297 = vsub.s32 0, %v296
  %v298 = vrot.slane %v294, %v297
  %v299 = vmul.f32 %v298, %v289
  %v300 = vld [vmem:[%s2 + $0x11] sm:$0x1]
  %v301 = vlaneseq
  %v302 = vshrl.u32 %v301, 7
  %v303 = vsub.s32 0, %v302
  %v304 = vrot.slane %v300, %v303
  %v305 = vmul.f32 %v304, %v289
  %v306 = vld [vmem:[%s2 + $0xd] sm:$0x1]
  %v307 = vlaneseq
  %v308 = vshrl.u32 %v307, 7
  %v309 = vsub.s32 0, %v308
  %v310 = vrot.slane %v306, %v309
  %v311 = vmul.f32 %v310, %v291
  %v312 = vadd.f32 %v299, %v311
  %v313 = vld [vmem:[%s2 + $0x10] sm:$0x1]
  %v314 = vlaneseq
  %v315 = vshrl.u32 %v314, 7
  %v316 = vsub.s32 0, %v315
  %v317 = vrot.slane %v313, %v316
  %v318 = vmul.f32 %v317, %v291
  %v319 = vadd.f32 %v305, %v318
  %v320 = vld [vmem:[%s2 + $0xc] sm:$0x1]
  %v321 = vlaneseq
  %v322 = vshrl.u32 %v321, 7
  %v323 = vsub.s32 0, %v322
  %v324 = vrot.slane %v320, %v323
  %v325 = vmul.f32 %v324, %v293
  %v326 = vadd.f32 %v312, %v325
  %v327 = vld [vmem:[%s2 + $0xf] sm:$0x1]
  %v328 = vlaneseq
  %v329 = vshrl.u32 %v328, 7
  %v330 = vsub.s32 0, %v329
  %v331 = vrot.slane %v327, %v330
  %v332 = vmul.f32 %v331, %v293
  %v333 = vadd.f32 %v319, %v332
  %v334 = vld [vmem:[%s2 + $0x12] sm:$0x1]
  %v335 = vlaneseq
  %v336 = vshrl.u32 %v335, 7
  %v337 = vsub.s32 0, %v336
  %v338 = vrot.slane %v334, %v337
  %v339 = vadd.f32 %v326, %v338
  %v340 = vtanh.pop %v339
  %v341 = vld [vmem:[%s2 + $0x13] sm:$0x1]
  %v342 = vlaneseq
  %v343 = vshrl.u32 %v342, 7
  %v344 = vsub.s32 0, %v343
  %v345 = vrot.slane %v341, %v344
  %v346 = vadd.f32 %v333, %v345
  %v347 = vxor.u32 %v346, 2147483648
  %v348 = vmul.f32 %v347, 1.442695
  %v349 = vpow.pop %v348
  %v350 = vadd.f32 %v349, 1.0
  %v351 = vrcp.pop %v350
  %v352 = vmul.f32 1.0, %v351
  %v353 = vmul.f32 %v340, %v352
  %v354 = vmul.f32 %v353, %v125
  %v356 = vsel %vm127, %v353, 0
  %358 = vmatprep.subr.mxu0 0.0
  %359 = vmatpush1.msra.mxu0 %v23
  %360 = vmatprep.subr.mxu0 0.0
  %361 = vmatpush1.msra.mxu0 %v24
  %362 = vmatprep.subr.mxu0 0.0
  %363 = vmatpush1.msra.mxu0 %v25
  %364 = vmatprep.subr.mxu0 0.0
  %365 = vmatpush1.msra.mxu0 %v26
  %366 = vmatprep.subr.mxu0 0.0
  %367 = vmatpush1.msra.mxu0 %v27
  %368 = vmatprep.subr.mxu0 0.0
  %369 = vmatpush1.msra.mxu0 %v28
  %370 = vmatprep.subr.mxu0 0.0
  %371 = vmatpush1.msra.mxu0 %v29
  %372 = vmatprep.subr.mxu0 0.0
  %373 = vmatpush1.msra.mxu0 %v30
  %374 = vmatprep.subr.mxu0 0.0
  %375 = vmatpush1.msra.mxu0 0.0
  %376 = vmatprep.subr.mxu0 0.0
  %377 = vmatpush1.msra.mxu0 0.0
  %378 = vmatprep.subr.mxu0 0.0
  %379 = vmatpush1.msra.mxu0 0.0
  %380 = vmatprep.subr.mxu0 0.0
  %381 = vmatpush1.msra.mxu0 0.0
  %382 = vmatprep.subr.mxu0 0.0
  %383 = vmatpush1.msra.mxu0 0.0
  %384 = vmatprep.subr.mxu0 0.0
  %385 = vmatpush1.msra.mxu0 0.0
  %386 = vmatprep.subr.mxu0 0.0
  %387 = vmatpush1.msra.mxu0 0.0
  %388 = vmatprep.subr.mxu0 0.0
  %389 = vmatpush1.msra.mxu0 0.0
  %390 = vmatprep.subr.mxu0 0.0
  %391 = vmatpush1.msra.mxu0 0.0
  %392 = vmatprep.subr.mxu0 0.0
  %393 = vmatpush1.msra.mxu0 0.0
  %394 = vmatprep.subr.mxu0 0.0
  %395 = vmatpush1.msra.mxu0 0.0
  %396 = vmatprep.subr.mxu0 0.0
  %397 = vmatpush1.msra.mxu0 0.0
  %398 = vmatprep.subr.mxu0 0.0
  %399 = vmatpush1.msra.mxu0 0.0
  %400 = vmatprep.subr.mxu0 0.0
  %401 = vmatpush1.msra.mxu0 0.0
  %402 = vmatprep.subr.mxu0 0.0
  %403 = vmatpush1.msra.mxu0 0.0
  %404 = vmatprep.subr.mxu0 0.0
  %405 = vmatpush1.msra.mxu0 0.0
  %406 = vmatprep.subr.mxu0 0.0
  %407 = vmatpush1.msra.mxu0 0.0
  %408 = vmatprep.subr.mxu0 0.0
  %409 = vmatpush1.msra.mxu0 0.0
  %410 = vmatprep.subr.mxu0 0.0
  %411 = vmatpush1.msra.mxu0 0.0
  %412 = vmatprep.subr.mxu0 0.0
  %413 = vmatpush1.msra.mxu0 0.0
  %414 = vmatprep.subr.mxu0 0.0
  %415 = vmatpush1.msra.mxu0 0.0
  %416 = vmatprep.subr.mxu0 0.0
  %417 = vmatpush1.msra.mxu0 0.0
  %418 = vmatprep.subr.mxu0 0.0
  %419 = vmatpush1.msra.mxu0 0.0
  %420 = vmatprep.subr.mxu0 0.0
  %421 = vmatpush1.msra.mxu0 0.0
  %422 = vmatprep.mubr.f32.mxu0 0.0
  %423 = vmatmul.mubr.f32.gmra.mrb[0].mxu0 %v356
  %v424 = vpop.f32.mrb[0].mxu0
  %v425 = vadd.f32 0.0, %v424
  %v426 = vpop.f32.mrb[0].mxu0
  %427 = vdwg.mxu0
  %v428 = vadd.f32 %v354, %v425
  %v430 = vsel %vm127, %v428, 0
  %432 = vmatprep.subr.mxu0 0.0
  %433 = vmatpush1.msra.mxu0 %v23
  %434 = vmatprep.subr.mxu0 0.0
  %435 = vmatpush1.msra.mxu0 %v24
  %436 = vmatprep.subr.mxu0 0.0
  %437 = vmatpush1.msra.mxu0 %v25
  %438 = vmatprep.subr.mxu0 0.0
  %439 = vmatpush1.msra.mxu0 %v26
  %440 = vmatprep.subr.mxu0 0.0
  %441 = vmatpush1.msra.mxu0 %v27
  %442 = vmatprep.subr.mxu0 0.0
  %443 = vmatpush1.msra.mxu0 %v28
  %444 = vmatprep.subr.mxu0 0.0
  %445 = vmatpush1.msra.mxu0 %v29
  %446 = vmatprep.subr.mxu0 0.0
  %447 = vmatpush1.msra.mxu0 %v30
  %448 = vmatprep.subr.mxu0 0.0
  %449 = vmatpush1.msra.mxu0 0.0
  %450 = vmatprep.subr.mxu0 0.0
  %451 = vmatpush1.msra.mxu0 0.0
  %452 = vmatprep.subr.mxu0 0.0
  %453 = vmatpush1.msra.mxu0 0.0
  %454 = vmatprep.subr.mxu0 0.0
  %455 = vmatpush1.msra.mxu0 0.0
  %456 = vmatprep.subr.mxu0 0.0
  %457 = vmatpush1.msra.mxu0 0.0
  %458 = vmatprep.subr.mxu0 0.0
  %459 = vmatpush1.msra.mxu0 0.0
  %460 = vmatprep.subr.mxu0 0.0
  %461 = vmatpush1.msra.mxu0 0.0
  %462 = vmatprep.subr.mxu0 0.0
  %463 = vmatpush1.msra.mxu0 0.0
  %464 = vmatprep.subr.mxu0 0.0
  %465 = vmatpush1.msra.mxu0 0.0
  %466 = vmatprep.subr.mxu0 0.0
  %467 = vmatpush1.msra.mxu0 0.0
  %468 = vmatprep.subr.mxu0 0.0
  %469 = vmatpush1.msra.mxu0 0.0
  %470 = vmatprep.subr.mxu0 0.0
  %471 = vmatpush1.msra.mxu0 0.0
  %472 = vmatprep.subr.mxu0 0.0
  %473 = vmatpush1.msra.mxu0 0.0
  %474 = vmatprep.subr.mxu0 0.0
  %475 = vmatpush1.msra.mxu0 0.0
  %476 = vmatprep.subr.mxu0 0.0
  %477 = vmatpush1.msra.mxu0 0.0
  %478 = vmatprep.subr.mxu0 0.0
  %479 = vmatpush1.msra.mxu0 0.0
  %480 = vmatprep.subr.mxu0 0.0
  %481 = vmatpush1.msra.mxu0 0.0
  %482 = vmatprep.subr.mxu0 0.0
  %483 = vmatpush1.msra.mxu0 0.0
  %484 = vmatprep.subr.mxu0 0.0
  %485 = vmatpush1.msra.mxu0 0.0
  %486 = vmatprep.subr.mxu0 0.0
  %487 = vmatpush1.msra.mxu0 0.0
  %488 = vmatprep.subr.mxu0 0.0
  %489 = vmatpush1.msra.mxu0 0.0
  %490 = vmatprep.subr.mxu0 0.0
  %491 = vmatpush1.msra.mxu0 0.0
  %492 = vmatprep.subr.mxu0 0.0
  %493 = vmatpush1.msra.mxu0 0.0
  %494 = vmatprep.subr.mxu0 0.0
  %495 = vmatpush1.msra.mxu0 0.0
  %496 = vmatprep.mubr.f32.mxu0 0.0
  %497 = vmatmul.mubr.f32.gmra.mrb[0].mxu0 %v430
  %v498 = vpop.f32.mrb[0].mxu0
  %v499 = vadd.f32 0.0, %v498
  %v500 = vpop.f32.mrb[0].mxu0
  %501 = vdwg.mxu0
  %v502 = vadd.f32 %v354, %v499
  %v503 = vadd.f32 %v428, %v502
  %v504 = vld [vmem:[%s2 + $0x14] sm:$0x1]
  %v505 = vlaneseq
  %v506 = vshrl.u32 %v505, 7
  %v507 = vsub.s32 0, %v506
  %v508 = vrot.slane %v504, %v507
  %v509 = vmul.f32 %v503, %v508
  %v510 = vadd.f32 %v289, %v509
  %v511 = vld [vmem:[%s2 + $0x15] sm:$0x1]
  %v512 = vlaneseq
  %v513 = vshrl.u32 %v512, 7
  %v514 = vsub.s32 0, %v513
  %v515 = vrot.slane %v511, %v514
  %v516 = vadd.f32 %v510, %v515
  %v517 = vld [vmem:[%s2 + $0x16] sm:$0x1]
  %v518 = vlaneseq
  %v519 = vshrl.u32 %v518, 7
  %v520 = vsub.s32 0, %v519
  %v521 = vrot.slane %v517, %v520
  %v522 = vmul.f32 %v521, %v54
  %v523 = vld [vmem:[%s2 + $0x17] sm:$0x1]
  %v524 = vlaneseq
  %v525 = vshrl.u32 %v524, 7
  %v526 = vsub.s32 0, %v525
  %v527 = vrot.slane %v523, %v526
  %v528 = vmul.f32 %v527, %v120
  %v529 = vadd.f32 %v522, %v528
  %v530 = vld [vmem:[%s2 + $0x18] sm:$0x1]
  %v531 = vlaneseq
  %v532 = vshrl.u32 %v531, 7
  %v533 = vsub.s32 0, %v532
  %v534 = vrot.slane %v530, %v533
  %v535 = vmul.f32 %v534, %v353
  %v536 = vadd.f32 %v529, %v535
  %v537 = vld [vmem:[%s2 + $0x19] sm:$0x1]
  %v538 = vlaneseq
  %v539 = vshrl.u32 %v538, 7
  %v540 = vsub.s32 0, %v539
  %v541 = vrot.slane %v537, %v540
  %v542 = vmul.f32 %v541, %v516
  %v543 = vadd.f32 %v536, %v542
  %v544 = vld [vmem:[%s2 + $0x1a] sm:$0x1]
  %v545 = vlaneseq
  %v546 = vshrl.u32 %v545, 7
  %v547 = vsub.s32 0, %v546
  %v548 = vrot.slane %v544, %v547
  %v549 = vadd.f32 %v543, %v548
  %v550 = vld [vmem:[%s2 + $0x1b] sm:$0x1]
  %v551 = vlaneseq
  %v552 = vshrl.u32 %v551, 7
  %v553 = vsub.s32 0, %v552
  %v554 = vrot.slane %v550, %v553
  %v555 = vmul.f32 %v549, %v554
  %v556 = vld [vmem:[%s2 + $0x1c] sm:$0x1]
  %v557 = vlaneseq
  %v558 = vshrl.u32 %v557, 7
  %v559 = vsub.s32 0, %v558
  %v560 = vrot.slane %v556, %v559
  %v561 = vadd.f32 %v555, %v560
  %v562 = vmul.f32 %v561, 0.5
  %v563 = vmul.f32 %v561, 0.044715
  %v564 = vmul.f32 %v563, %v561
  %v565 = vmul.f32 %v564, %v561
  %v566 = vadd.f32 %v561, %v565
  %v567 = vmul.f32 %v566, 0.7978846
  %v568 = vtanh.pop %v567
  %v569 = vadd.f32 %v568, 1.0
  %v570 = vmul.f32 %v562, %v569
  %v571 = vld [vmem:[%s2 + $0x1d] sm:$0x1]
  %v572 = vlaneseq
  %v573 = vshrl.u32 %v572, 7
  %v574 = vsub.s32 0, %v573
  %v575 = vrot.slane %v571, %v574
  %v576 = vmul.f32 %v570, %v575
  %v577 = vld [vmem:[%s2 + $0x1e] sm:$0x1]
  %v578 = vlaneseq
  %v579 = vshrl.u32 %v578, 7
  %v580 = vsub.s32 0, %v579
  %v581 = vrot.slane %v577, %v580
  %v582 = vadd.f32 %v576, %v581
  %v583 = vld [vmem:[%s2 + $0x1f] sm:$0x1]
  %v584 = vlaneseq
  %v585 = vshrl.u32 %v584, 7
  %v586 = vsub.s32 0, %v585
  %v587 = vrot.slane %v583, %v586
  %v588 = vmul.f32 %v582, %v587
  %v589 = vld [vmem:[%s2 + $0x20] sm:$0x1]
  %v590 = vlaneseq
  %v591 = vshrl.u32 %v590, 7
  %v592 = vsub.s32 0, %v591
  %v593 = vrot.slane %v589, %v592
  %v594 = vadd.f32 %v588, %v593
  %v595 = vmul.f32 %v594, 0.5
  %v596 = vmul.f32 %v594, 0.044715
  %v597 = vmul.f32 %v596, %v594
  %v598 = vmul.f32 %v597, %v594
  %v599 = vadd.f32 %v594, %v598
  %v600 = vmul.f32 %v599, 0.7978846
  %v601 = vtanh.pop %v600
  %v602 = vadd.f32 %v601, 1.0
  %v603 = vmul.f32 %v595, %v602
  %v604 = vld [vmem:[%s2 + $0x21] sm:$0x1]
  %v605 = vlaneseq
  %v606 = vshrl.u32 %v605, 7
  %v607 = vsub.s32 0, %v606
  %v608 = vrot.slane %v604, %v607
  %v610 = vsel %vm127, %v603, 0
  %612 = vmatprep.subr.mxu0 0.0
  %613 = vmatpush1.msra.mxu0 %v32
  %614 = vmatprep.subr.mxu0 0.0
  %615 = vmatpush1.msra.mxu0 %v33
  %616 = vmatprep.subr.mxu0 0.0
  %617 = vmatpush1.msra.mxu0 %v34
  %618 = vmatprep.subr.mxu0 0.0
  %619 = vmatpush1.msra.mxu0 %v35
  %620 = vmatprep.subr.mxu0 0.0
  %621 = vmatpush1.msra.mxu0 %v36
  %622 = vmatprep.subr.mxu0 0.0
  %623 = vmatpush1.msra.mxu0 %v37
  %624 = vmatprep.subr.mxu0 0.0
  %625 = vmatpush1.msra.mxu0 %v38
  %626 = vmatprep.subr.mxu0 0.0
  %627 = vmatpush1.msra.mxu0 %v39
  %628 = vmatprep.subr.mxu0 0.0
  %629 = vmatpush1.msra.mxu0 0.0
  %630 = vmatprep.subr.mxu0 0.0
  %631 = vmatpush1.msra.mxu0 0.0
  %632 = vmatprep.subr.mxu0 0.0
  %633 = vmatpush1.msra.mxu0 0.0
  %634 = vmatprep.subr.mxu0 0.0
  %635 = vmatpush1.msra.mxu0 0.0
  %636 = vmatprep.subr.mxu0 0.0
  %637 = vmatpush1.msra.mxu0 0.0
  %638 = vmatprep.subr.mxu0 0.0
  %639 = vmatpush1.msra.mxu0 0.0
  %640 = vmatprep.subr.mxu0 0.0
  %641 = vmatpush1.msra.mxu0 0.0
  %642 = vmatprep.subr.mxu0 0.0
  %643 = vmatpush1.msra.mxu0 0.0
  %644 = vmatprep.subr.mxu0 0.0
  %645 = vmatpush1.msra.mxu0 0.0
  %646 = vmatprep.subr.mxu0 0.0
  %647 = vmatpush1.msra.mxu0 0.0
  %648 = vmatprep.subr.mxu0 0.0
  %649 = vmatpush1.msra.mxu0 0.0
  %650 = vmatprep.subr.mxu0 0.0
  %651 = vmatpush1.msra.mxu0 0.0
  %652 = vmatprep.subr.mxu0 0.0
  %653 = vmatpush1.msra.mxu0 0.0
  %654 = vmatprep.subr.mxu0 0.0
  %655 = vmatpush1.msra.mxu0 0.0
  %656 = vmatprep.subr.mxu0 0.0
  %657 = vmatpush1.msra.mxu0 0.0
  %658 = vmatprep.subr.mxu0 0.0
  %659 = vmatpush1.msra.mxu0 0.0
  %660 = vmatprep.subr.mxu0 0.0
  %661 = vmatpush1.msra.mxu0 0.0
  %662 = vmatprep.subr.mxu0 0.0
  %663 = vmatpush1.msra.mxu0 0.0
  %664 = vmatprep.subr.mxu0 0.0
  %665 = vmatpush1.msra.mxu0 0.0
  %666 = vmatprep.subr.mxu0 0.0
  %667 = vmatpush1.msra.mxu0 0.0
  %668 = vmatprep.subr.mxu0 0.0
  %669 = vmatpush1.msra.mxu0 0.0
  %670 = vmatprep.subr.mxu0 0.0
  %671 = vmatpush1.msra.mxu0 0.0
  %672 = vmatprep.subr.mxu0 0.0
  %673 = vmatpush1.msra.mxu0 0.0
  %674 = vmatprep.subr.mxu0 0.0
  %675 = vmatpush1.msra.mxu0 0.0
  %676 = vmatprep.mubr.f32.mxu0 0.0
  %677 = vmatmul.mubr.f32.gmra.mrb[0].mxu0 %v610
  %v678 = vpop.f32.mrb[0].mxu0
  %v679 = vadd.f32 %v608, %v678
  %v680 = vpop.f32.mrb[0].mxu0
  %681 = vdwg.mxu0
  %v682 = vadd.f32 %v570, %v679
  %v683 = vmul.f32 %v682, 0.5
  %v684 = vmul.f32 %v682, 0.044715
  %v685 = vmul.f32 %v684, %v682
  %v686 = vmul.f32 %v685, %v682
  %v687 = vadd.f32 %v682, %v686
  %v688 = vmul.f32 %v687, 0.7978846
  %v689 = vtanh.pop %v688
  %v690 = vadd.f32 %v689, 1.0
  %v691 = vmul.f32 %v683, %v690
  %v692 = vld [vmem:[%s4] sm:$0xff]
  %v693 = vld [vmem:[%s5] sm:$0xff]
  %695 = vrot.lane.b32.xlu0 %v691, 112
  %v696 = vpop.permute.xlu0 %695
  %698 = vrot.lane.b32.xlu0 %v691, 96
  %v699 = vpop.permute.xlu0 %698
  %701 = vrot.lane.b32.xlu0 %v691, 80
  %v702 = vpop.permute.xlu0 %701
  %705 = vset.pattern.permute.xlu0 0
  %706 = vperm.xlu0 %705, %v693
  %v707 = vpop.permute.xlu0 %706
  %vm709 = vcmask 261120
  %v711 = vsel %vm709, %v692, 0
  %713 = vmatprep.subr.mxu0 0.0
  %714 = vmatpush1.msra.mxu0 %v691
  %715 = vmatprep.subr.mxu0 0.0
  %716 = vmatpush1.msra.mxu0 %v696
  %717 = vmatprep.subr.mxu0 0.0
  %718 = vmatpush1.msra.mxu0 %v699
  %719 = vmatprep.subr.mxu0 0.0
  %720 = vmatpush1.msra.mxu0 %v702
  %721 = vmatprep.subr.mxu0 0.0
  %722 = vmatpush1.msra.mxu0 0.0
  %723 = vmatprep.subr.mxu0 0.0
  %724 = vmatpush1.msra.mxu0 0.0
  %725 = vmatprep.subr.mxu0 0.0
  %726 = vmatpush1.msra.mxu0 0.0
  %727 = vmatprep.subr.mxu0 0.0
  %728 = vmatpush1.msra.mxu0 0.0
  %729 = vmatprep.subr.mxu0 0.0
  %730 = vmatpush1.msra.mxu0 0.0
  %731 = vmatprep.subr.mxu0 0.0
  %732 = vmatpush1.msra.mxu0 0.0
  %733 = vmatprep.subr.mxu0 0.0
  %734 = vmatpush1.msra.mxu0 0.0
  %735 = vmatprep.subr.mxu0 0.0
  %736 = vmatpush1.msra.mxu0 0.0
  %737 = vmatprep.subr.mxu0 0.0
  %738 = vmatpush1.msra.mxu0 0.0
  %739 = vmatprep.subr.mxu0 0.0
  %740 = vmatpush1.msra.mxu0 0.0
  %741 = vmatprep.subr.mxu0 0.0
  %742 = vmatpush1.msra.mxu0 0.0
  %743 = vmatprep.subr.mxu0 0.0
  %744 = vmatpush1.msra.mxu0 0.0
  %745 = vmatprep.subr.mxu0 0.0
  %746 = vmatpush1.msra.mxu0 0.0
  %747 = vmatprep.subr.mxu0 0.0
  %748 = vmatpush1.msra.mxu0 0.0
  %749 = vmatprep.subr.mxu0 0.0
  %750 = vmatpush1.msra.mxu0 0.0
  %751 = vmatprep.subr.mxu0 0.0
  %752 = vmatpush1.msra.mxu0 0.0
  %753 = vmatprep.subr.mxu0 0.0
  %754 = vmatpush1.msra.mxu0 0.0
  %755 = vmatprep.subr.mxu0 0.0
  %756 = vmatpush1.msra.mxu0 0.0
  %757 = vmatprep.subr.mxu0 0.0
  %758 = vmatpush1.msra.mxu0 0.0
  %759 = vmatprep.subr.mxu0 0.0
  %760 = vmatpush1.msra.mxu0 0.0
  %761 = vmatprep.subr.mxu0 0.0
  %762 = vmatpush1.msra.mxu0 0.0
  %763 = vmatprep.subr.mxu0 0.0
  %764 = vmatpush1.msra.mxu0 0.0
  %765 = vmatprep.subr.mxu0 0.0
  %766 = vmatpush1.msra.mxu0 0.0
  %767 = vmatprep.subr.mxu0 0.0
  %768 = vmatpush1.msra.mxu0 0.0
  %769 = vmatprep.subr.mxu0 0.0
  %770 = vmatpush1.msra.mxu0 0.0
  %771 = vmatprep.subr.mxu0 0.0
  %772 = vmatpush1.msra.mxu0 0.0
  %773 = vmatprep.subr.mxu0 0.0
  %774 = vmatpush1.msra.mxu0 0.0
  %775 = vmatprep.subr.mxu0 0.0
  %776 = vmatpush1.msra.mxu0 0.0
  %777 = vmatprep.mubr.f32.mxu0 0.0
  %778 = vmatmul.mubr.f32.gmra.mrb[0].mxu0 %v711
  %v779 = vpop.f32.mrb[0].mxu0
  %v780 = vadd.f32 %v707, %v779
  %v781 = vpop.f32.mrb[0].mxu0
  %782 = vdwg.mxu0
  %v783 = vtanh.pop %v780
  %v784 = vld [vmem:[%s1] sm:$0xff]
  %v785 = vrot.slane %v784, 7
  %v786 = vsel %vm55, %v785, 0.0
  %v787 = vrot.slane %v784, 6
  %v788 = vsel %vm58, %v787, 0.0
  %v789 = vld [vmem:[%s2 + $0x24] sm:$0x1]
  %v790 = vlaneseq
  %v791 = vshrl.u32 %v790, 7
  %v792 = vsub.s32 0, %v791
  %v793 = vrot.slane %v789, %v792
  %v794 = vmul.f32 %v793, %v784
  %v795 = vld [vmem:[%s2 + $0x27] sm:$0x1]
  %v796 = vlaneseq
  %v797 = vshrl.u32 %v796, 7
  %v798 = vsub.s32 0, %v797
  %v799 = vrot.slane %v795, %v798
  %v800 = vmul.f32 %v799, %v784
  %v801 = vld [vmem:[%s2 + $0x23] sm:$0x1]
  %v802 = vlaneseq
  %v803 = vshrl.u32 %v802, 7
  %v804 = vsub.s32 0, %v803
  %v805 = vrot.slane %v801, %v804
  %v806 = vmul.f32 %v805, %v786
  %v807 = vadd.f32 %v794, %v806
  %v808 = vld [vmem:[%s2 + $0x26] sm:$0x1]
  %v809 = vlaneseq
  %v810 = vshrl.u32 %v809, 7
  %v811 = vsub.s32 0, %v810
  %v812 = vrot.slane %v808, %v811
  %v813 = vmul.f32 %v812, %v786
  %v814 = vadd.f32 %v800, %v813
  %v815 = vld [vmem:[%s2 + $0x22] sm:$0x1]
  %v816 = vlaneseq
  %v817 = vshrl.u32 %v816, 7
  %v818 = vsub.s32 0, %v817
  %v819 = vrot.slane %v815, %v818
  %v820 = vmul.f32 %v819, %v788
  %v821 = vadd.f32 %v807, %v820
  %v822 = vld [vmem:[%s2 + $0x25] sm:$0x1]
  %v823 = vlaneseq
  %v824 = vshrl.u32 %v823, 7
  %v825 = vsub.s32 0, %v824
  %v826 = vrot.slane %v822, %v825
  %v827 = vmul.f32 %v826, %v788
  %v828 = vadd.f32 %v814, %v827
  %v829 = vld [vmem:[%s2 + $0x28] sm:$0x1]
  %v830 = vlaneseq
  %v831 = vshrl.u32 %v830, 7
  %v832 = vsub.s32 0, %v831
  %v833 = vrot.slane %v829, %v832
  %v834 = vadd.f32 %v821, %v833
  %v835 = vtanh.pop %v834
  %v836 = vld [vmem:[%s2 + $0x29] sm:$0x1]
  %v837 = vlaneseq
  %v838 = vshrl.u32 %v837, 7
  %v839 = vsub.s32 0, %v838
  %v840 = vrot.slane %v836, %v839
  %v841 = vadd.f32 %v828, %v840
  %v842 = vxor.u32 %v841, 2147483648
  %v843 = vmul.f32 %v842, 1.442695
  %v844 = vpow.pop %v843
  %v845 = vadd.f32 %v844, 1.0
  %v846 = vrcp.pop %v845
  %v847 = vmul.f32 1.0, %v846
  %v848 = vmul.f32 %v835, %v847
  %v849 = vadd.f32 %v784, %v848
  %851 = vrot.lane.b32.xlu0 %v849, 112
  %v852 = vpop.permute.xlu0 %851
  %854 = vrot.lane.b32.xlu0 %v849, 96
  %v855 = vpop.permute.xlu0 %854
  %857 = vrot.lane.b32.xlu0 %v849, 80
  %v858 = vpop.permute.xlu0 %857
  %v860 = vrot.slane %v692, 4
  %v861 = vrot.slane %v707, 4
  %v863 = vsel %vm709, %v860, 0
  %865 = vmatprep.subr.mxu0 0.0
  %866 = vmatpush1.msra.mxu0 %v849
  %867 = vmatprep.subr.mxu0 0.0
  %868 = vmatpush1.msra.mxu0 %v852
  %869 = vmatprep.subr.mxu0 0.0
  %870 = vmatpush1.msra.mxu0 %v855
  %871 = vmatprep.subr.mxu0 0.0
  %872 = vmatpush1.msra.mxu0 %v858
  %873 = vmatprep.subr.mxu0 0.0
  %874 = vmatpush1.msra.mxu0 0.0
  %875 = vmatprep.subr.mxu0 0.0
  %876 = vmatpush1.msra.mxu0 0.0
  %877 = vmatprep.subr.mxu0 0.0
  %878 = vmatpush1.msra.mxu0 0.0
  %879 = vmatprep.subr.mxu0 0.0
  %880 = vmatpush1.msra.mxu0 0.0
  %881 = vmatprep.subr.mxu0 0.0
  %882 = vmatpush1.msra.mxu0 0.0
  %883 = vmatprep.subr.mxu0 0.0
  %884 = vmatpush1.msra.mxu0 0.0
  %885 = vmatprep.subr.mxu0 0.0
  %886 = vmatpush1.msra.mxu0 0.0
  %887 = vmatprep.subr.mxu0 0.0
  %888 = vmatpush1.msra.mxu0 0.0
  %889 = vmatprep.subr.mxu0 0.0
  %890 = vmatpush1.msra.mxu0 0.0
  %891 = vmatprep.subr.mxu0 0.0
  %892 = vmatpush1.msra.mxu0 0.0
  %893 = vmatprep.subr.mxu0 0.0
  %894 = vmatpush1.msra.mxu0 0.0
  %895 = vmatprep.subr.mxu0 0.0
  %896 = vmatpush1.msra.mxu0 0.0
  %897 = vmatprep.subr.mxu0 0.0
  %898 = vmatpush1.msra.mxu0 0.0
  %899 = vmatprep.subr.mxu0 0.0
  %900 = vmatpush1.msra.mxu0 0.0
  %901 = vmatprep.subr.mxu0 0.0
  %902 = vmatpush1.msra.mxu0 0.0
  %903 = vmatprep.subr.mxu0 0.0
  %904 = vmatpush1.msra.mxu0 0.0
  %905 = vmatprep.subr.mxu0 0.0
  %906 = vmatpush1.msra.mxu0 0.0
  %907 = vmatprep.subr.mxu0 0.0
  %908 = vmatpush1.msra.mxu0 0.0
  %909 = vmatprep.subr.mxu0 0.0
  %910 = vmatpush1.msra.mxu0 0.0
  %911 = vmatprep.subr.mxu0 0.0
  %912 = vmatpush1.msra.mxu0 0.0
  %913 = vmatprep.subr.mxu0 0.0
  %914 = vmatpush1.msra.mxu0 0.0
  %915 = vmatprep.subr.mxu0 0.0
  %916 = vmatpush1.msra.mxu0 0.0
  %917 = vmatprep.subr.mxu0 0.0
  %918 = vmatpush1.msra.mxu0 0.0
  %919 = vmatprep.subr.mxu0 0.0
  %920 = vmatpush1.msra.mxu0 0.0
  %921 = vmatprep.subr.mxu0 0.0
  %922 = vmatpush1.msra.mxu0 0.0
  %923 = vmatprep.subr.mxu0 0.0
  %924 = vmatpush1.msra.mxu0 0.0
  %925 = vmatprep.subr.mxu0 0.0
  %926 = vmatpush1.msra.mxu0 0.0
  %927 = vmatprep.subr.mxu0 0.0
  %928 = vmatpush1.msra.mxu0 0.0
  %929 = vmatprep.mubr.f32.mxu0 0.0
  %930 = vmatmul.mubr.f32.gmra.mrb[0].mxu0 %v863
  %v931 = vpop.f32.mrb[0].mxu0
  %v932 = vadd.f32 %v861, %v931
  %v933 = vpop.f32.mrb[0].mxu0
  %934 = vdwg.mxu0
  %v935 = vxor.u32 %v932, 2147483648
  %v936 = vmul.f32 %v935, 1.442695
  %v937 = vpow.pop %v936
  %v938 = vadd.f32 %v937, 1.0
  %v939 = vrcp.pop %v938
  %v940 = vmul.f32 1.0, %v939
  %v941 = vmul.f32 %v783, %v940
  %v943 = vrot.slane %v783, 4
  %vm945 = vcmask 1043456
  %v946 = vsel %vm945, %v941, %v943
  %vm947 = vcmask 130048
  %948 = vst.msk [vmem:[%s6] sm:$0xff] %vm947, %v946
  %vm949 = vcmask 125952
  %950 = vst.msk [vmem:[%s6 + $0x8] sm:$0xf] %vm949, %v940
  // Predicated region
  $region26: #{hetero_mtgnn_forward.1} parent=0 // pred_check
    _
  $region27: #{hetero_mtgnn_forward.1} parent=0 // pred_check_branch
    %952 = sbr.rel (0) target = $region29
  $region28: #{hetero_mtgnn_forward.1} parent=0 // pred_region
    _
  $region29: #{hetero_mtgnn_forward.1} parent=0 // pred_fallthru
    _
  // Predicated region
  $region30: #{hetero_mtgnn_forward.1} parent=0 // pred_check
    _
  $region31: #{hetero_mtgnn_forward.1} parent=0 // pred_check_branch
    %954 = sbr.rel (0) target = $region33
  $region32: #{hetero_mtgnn_forward.1} parent=0 // pred_region
    _
  $region33: #{hetero_mtgnn_forward.1} parent=0 // pred_fallthru
    _

</llo_original>
